<compile_context>
chip_gen: v7x
topology: tpu7x:2x2x1
jax: 0.10.0
libtpu: 0.0.40
codegen_flags: <defaults>
</compile_context>

<pallas_src>
import functools
import math

import jax
import jax.numpy as jnp
from jax import lax
from jax.experimental import pallas as pl
from jax.experimental.pallas import tpu as pltpu


# ---------------------------------------------------------------------------
# Pallas kernel: fused (in-kernel K-packed im2col) conv + bias + LeakyReLU
# ---------------------------------------------------------------------------
def _conv_lrelu_kernel(x_ref, w_ref, b_ref, o_ref, *, kh, kw, tr, out_w,
                       slope, k_packed):
    # x_ref: (1, hp_pad, wp, cin)   padded image, VMEM-resident across row tiles
    # w_ref: (kh*kw*cin, cout)      K-packed weights (tap-major, channel-minor)
    # b_ref: (1, cout)              float32
    # o_ref: (1, tr, out_w, cout)
    cin = x_ref.shape[-1]
    cout = w_ref.shape[-1]
    m = tr * out_w
    r0 = pl.multiple_of(pl.program_id(1) * tr, tr)    # first output row of tile

    # kh*kw shifted (1, tr, out_w, cin) windows, read straight from the
    # resident image (shifted VMEM loads; nothing is materialised in HBM).
    taps = [x_ref[:, pl.ds(r0 + ki, tr), pl.ds(kj, out_w), :]
            for ki in range(kh) for kj in range(kw)]

    if k_packed:
        # Pack all taps along the contraction axis -> a single MXU matmul per
        # row tile with K = kh*kw*cin real columns (no zero-padded K work).
        a = jnp.concatenate(taps, axis=-1).reshape(m, kh * kw * cin)
        y = jnp.dot(a, w_ref[...], preferred_element_type=jnp.float32)
    else:
        # Fallback: per-tap chained accumulation.  The accumulator is small
        # (M capped by the row tile) so the += chain never round-trips VMEM.
        y = jnp.zeros((m, cout), jnp.float32)
        for t, tap in enumerate(taps):
            y = y + jnp.dot(tap.reshape(m, cin),
                            w_ref[pl.ds(t * cin, cin), :],
                            preferred_element_type=jnp.float32)

    y = y + b_ref[...]                       # bias in f32
    y = jnp.maximum(y, slope * y)            # LeakyReLU (slope in (0, 1))
    o_ref[...] = y.reshape(1, tr, out_w, cout).astype(o_ref.dtype)


# ---------------------------------------------------------------------------
# helpers
# ---------------------------------------------------------------------------
def _vmem_limit_bytes():
    """Raise the scoped VMEM limit on big-VMEM parts, cap it on v7x."""
    try:
        phys = pltpu.get_tpu_info().vmem_capacity_bytes
    except Exception:
        phys = 64 * 1024 * 1024             # conservative (v7x-sized) default
    return int(min(phys * 3 // 4, 96 * 1024 * 1024))


def _pick_row_tile(out_h, out_w, cout, k_elems, itemsize):
    """Cap M = tr*out_w so the f32 accumulator and the K-packed activation
    tile stay small (tens of KiB), while keeping enough rows to amortise the
    per-grid-step overhead."""
    budget = 128 * 1024
    m_max = max(64, budget // max(4 * cout, itemsize * k_elems))
    tr = max(1, min(out_h, m_max // max(out_w, 1)))
    if tr >= 8:
        tr = (tr // 8) * 8                  # sublane-aligned row tiles
    return tr


def _conv2d_lrelu(x_nhwc, w_oihw, b, *, padding, slope=0.1,
                  compute_dtype=jnp.bfloat16, out_dtype=None, k_packed=True):
    """Stride-1 Conv2d + bias + LeakyReLU as one fused Pallas kernel (real
    channel counts; no 128-lane padding)."""
    n, h, w_, cin = x_nhwc.shape
    cout, cin_w, kh, kw = w_oihw.shape
    assert cin == cin_w, (cin, cin_w)
    if out_dtype is None:
        out_dtype = compute_dtype

    hp, wp = h + 2 * padding, w_ + 2 * padding
    out_h, out_w = hp - kh + 1, wp - kw + 1
    k_elems = kh * kw * cin
    itemsize = jnp.dtype(compute_dtype).itemsize

    tr = _pick_row_tile(out_h, out_w, cout, k_elems, itemsize)
    n_row_tiles = pl.cdiv(out_h, tr)
    out_h_pad = n_row_tiles * tr
    extra = out_h_pad - out_h               # zero rows so tail reads stay in bounds

    xp = jnp.pad(x_nhwc.astype(compute_dtype),
                 ((0, 0), (padding, padding + extra), (padding, padding), (0, 0)))
    hp_pad = hp + extra

    # (Cout, Cin, kh, kw) -> (kh*kw*cin, Cout), tap-major / channel-minor,
    # matching the in-kernel tap enumeration order.
    wt = jnp.transpose(w_oihw, (2, 3, 1, 0)).reshape(k_elems, cout)
    wt = wt.astype(compute_dtype)
    bb = b.reshape(1, cout).astype(jnp.float32)

    # VMEM budget: the padded image block is revisited across row tiles (one
    # DMA per image) and double-buffered across the batch axis.
    vmem_limit = _vmem_limit_bytes()
    need = (2 * hp_pad * wp * cin * itemsize
            + 2 * tr * out_w * cout * jnp.dtype(out_dtype).itemsize
            + k_elems * cout * itemsize + (4 << 20))
    if need > vmem_limit:
        # TODO(synk): switch the input to a halo'd row-band block
        # (pl.Element on H with element offset t*tr) for large images instead
        # of keeping the whole padded image VMEM-resident.
        raise NotImplementedError(
            f"padded image too large for VMEM-resident blocking "
            f"({need} > {vmem_limit} bytes); needs the halo'd row-band path")

    kern = functools.partial(_conv_lrelu_kernel, kh=kh, kw=kw, tr=tr,
                             out_w=out_w, slope=slope, k_packed=k_packed)
    out = pl.pallas_call(
        kern,
        out_shape=jax.ShapeDtypeStruct((n, out_h_pad, out_w, cout), out_dtype),
        grid_spec=pltpu.PrefetchScalarGridSpec(
            num_scalar_prefetch=0,
            grid=(n, n_row_tiles),
            in_specs=[
                # whole padded image: DMA'd once per image, revisited across row tiles
                pl.BlockSpec((1, hp_pad, wp, cin), lambda i, t: (i, 0, 0, 0)),
                pl.BlockSpec((k_elems, cout), lambda i, t: (0, 0)),
                pl.BlockSpec((1, cout), lambda i, t: (0, 0)),
            ],
            out_specs=pl.BlockSpec((1, tr, out_w, cout),
                                   lambda i, t: (i, t, 0, 0)),
        ),
        compiler_params=pltpu.CompilerParams(
            dimension_semantics=("parallel", "parallel"),
            vmem_limit_bytes=vmem_limit,
        ),
    )(xp, wt, bb)
    if extra:
        out = out[:, :out_h]
    return out


# ---------------------------------------------------------------------------
# down2d forward (NCHW in / NCHW out, matching the PyTorch module)
# ---------------------------------------------------------------------------
def down2d_forward(params, x_nchw, *, slope=0.1, compute_dtype=jnp.bfloat16,
                   k_packed=True):
    n, cin, h, w_ = x_nchw.shape
    assert h % 2 == 0 and w_ % 2 == 0, "down2d needs even spatial dims"

    x = jnp.transpose(x_nchw, (0, 2, 3, 1))            # NCHW -> NHWC

    # ---- pooling2d: Conv2d(k=4, s=2, p=1) recast as a dense stride-1 2x2 conv
    #      over the 4 space-to-depth phases (no strided reads in the kernel).
    # TODO(synk): fold this pad + phase-split into the first kernel with
    # stride-2 pl.ds reads to save one HBM round trip of the input.
    xp = jnp.pad(x, ((0, 0), (1, 1), (1, 1), (0, 0)))
    xph = jnp.concatenate(
        [xp[:, pi::2, pj::2, :] for pi in (0, 1) for pj in (0, 1)],
        axis=-1)                                       # (N, H/2+1, W/2+1, 4*cin)
    co = params["w_pool"].shape[0]
    # w_pool[co,ci,2a+pi,2b+pj] -> w_eff[co, (pi,pj,ci), a, b]
    w_eff = jnp.transpose(params["w_pool"].reshape(co, cin, 2, 2, 2, 2),
                          (0, 3, 5, 1, 2, 4)).reshape(co, 4 * cin, 2, 2)
    y = _conv2d_lrelu(xph, w_eff, params["b_pool"], padding=0, slope=slope,
                      compute_dtype=compute_dtype, out_dtype=compute_dtype,
                      k_packed=k_packed)

    # ---- conv1 / conv2: stride-1 convs, fused conv+bias+LeakyReLU kernels ----
    fs = params["w1"].shape[2]
    y = _conv2d_lrelu(y, params["w1"], params["b1"], padding=(fs - 1) // 2,
                      slope=slope, compute_dtype=compute_dtype,
                      out_dtype=compute_dtype, k_packed=k_packed)
    y = _conv2d_lrelu(y, params["w2"], params["b2"], padding=(fs - 1) // 2,
                      slope=slope, compute_dtype=compute_dtype,
                      out_dtype=jnp.float32, k_packed=k_packed)

    return jnp.transpose(y, (0, 3, 1, 2))              # NHWC -> NCHW


# ---------------------------------------------------------------------------
# deterministic parameter init (PyTorch-style uniform bounds)
# ---------------------------------------------------------------------------
def init_params(key, in_c, out_c, fs):
    ks = jax.random.split(key, 6)

    def u(k, shape, fan_in):
        bound = 1.0 / math.sqrt(fan_in)
        return jax.random.uniform(k, shape, jnp.float32, -bound, bound)

    return {
        # Conv2d(in_c, in_c, 4, stride=2, padding=1)
        "w_pool": u(ks[0], (in_c, in_c, 4, 4), in_c * 16),
        "b_pool": u(ks[1], (in_c,), in_c * 16),
        # Conv2d(in_c, out_c, fs, padding=(fs-1)//2)
        "w1": u(ks[2], (out_c, in_c, fs, fs), in_c * fs * fs),
        "b1": u(ks[3], (out_c,), in_c * fs * fs),
        # Conv2d(out_c, out_c, fs, padding=(fs-1)//2)
        "w2": u(ks[4], (out_c, out_c, fs, fs), out_c * fs * fs),
        "b2": u(ks[5], (out_c,), out_c * fs * fs),
    }


# ---------------------------------------------------------------------------
# pure-JAX (lax.conv_general_dilated) reference for validation
# ---------------------------------------------------------------------------
def _lrelu(v, slope=0.1):
    return jnp.where(v > 0, v, slope * v)


def ref_forward(params, x_nchw, slope=0.1):
    dn = ("NCHW", "OIHW", "NCHW")
    hi = lax.Precision.HIGHEST
    fs = params["w1"].shape[2]
    p = (fs - 1) // 2
    y = lax.conv_general_dilated(x_nchw, params["w_pool"], (2, 2), [(1, 1), (1, 1)],
                                 dimension_numbers=dn, precision=hi)
    y = _lrelu(y + params["b_pool"][None, :, None, None], slope)
    y = lax.conv_general_dilated(y, params["w1"], (1, 1), [(p, p), (p, p)],
                                 dimension_numbers=dn, precision=hi)
    y = _lrelu(y + params["b1"][None, :, None, None], slope)
    y = lax.conv_general_dilated(y, params["w2"], (1, 1), [(p, p), (p, p)],
                                 dimension_numbers=dn, precision=hi)
    y = _lrelu(y + params["b2"][None, :, None, None], slope)
    return y


if __name__ == "__main__":
    key = jax.random.PRNGKey(0)
    kx, kp = jax.random.split(key)

    N, inC, outC, fs, H, W = 2, 4, 8, 3, 16, 16
    x = jax.random.normal(kx, (N, inC, H, W), jnp.float32)          # NCHW
    params = init_params(kp, inC, outC, fs)

    ref = jax.block_until_ready(ref_forward(params, x))

    # Production path: K-packed single-matmul kernel, bf16 MXU feed, f32 acc.
    # If this Mosaic build cannot lower the in-kernel minor-dim concatenation,
    # fall back to the per-tap chained-accumulation kernel (same math).
    k_packed = True
    try:
        out = jax.block_until_ready(down2d_forward(params, x, k_packed=True))
    except Exception:
        k_packed = False
        out = jax.block_until_ready(down2d_forward(params, x, k_packed=False))

    assert out.shape == (N, outC, H // 2, W // 2), out.shape
    assert jnp.allclose(out, ref, rtol=5e-2, atol=5e-2), \
        float(jnp.max(jnp.abs(out - ref)))

    # all-f32 path: tight numerical check of the kernel math itself
    out_f32 = jax.block_until_ready(
        down2d_forward(params, x, compute_dtype=jnp.float32, k_packed=k_packed))
    assert jnp.allclose(out_f32, ref, rtol=5e-4, atol=5e-4), \
        float(jnp.max(jnp.abs(out_f32 - ref)))

    print("KERNEL_OK")
</pallas_src>

<mosaic_0001>
module attributes {stable_mosaic.version = 11 : i64} {
  func.func @_conv_lrelu_kernel(%arg0: i32, %arg1: i32, %arg2: memref<1x9x9x16xbf16, #tpu.memory_space<vmem>>, %arg3: memref<64x4xbf16, #tpu.memory_space<vmem>>, %arg4: memref<1x4xf32, #tpu.memory_space<vmem>>, %arg5: memref<1x8x8x4xbf16, #tpu.memory_space<vmem>>) attributes {dimension_semantics = [#tpu.dimension_semantics<parallel>, #tpu.dimension_semantics<parallel>], iteration_bounds = array<i64: 2, 1>, scalar_prefetch = 0 : i64, scratch_operands = 0 : i64, tpu.core_type = #tpu.core_type<tc>, window_params = [{transform_indices = @transform_0, window_bounds = array<i64: 1, 9, 9, 16>}, {pipeline_mode = #tpu.pipeline_mode<synchronous>, transform_indices = @transform_1, window_bounds = array<i64: 64, 4>}, {pipeline_mode = #tpu.pipeline_mode<synchronous>, transform_indices = @transform_2, window_bounds = array<i64: 1, 4>}, {transform_indices = @transform_3, window_bounds = array<i64: 1, 8, 8, 4>}]} {
    %c8_i32 = arith.constant 8 : i32
    %0 = arith.muli %arg1, %c8_i32 : i32
    %1 = tpu.assume_multiple %0, 8 : i32
    %c0_i32 = arith.constant 0 : i32
    %2 = arith.addi %1, %c0_i32 : i32
    %c0 = arith.constant 0 : index
    %3 = arith.index_cast %2 : i32 to index
    %c0_0 = arith.constant 0 : index
    %c0_1 = arith.constant 0 : index
    %4 = vector.load %arg2[%c0, %3, %c0_0, %c0_1] : memref<1x9x9x16xbf16, #tpu.memory_space<vmem>>, vector<1x8x8x16xbf16>
    %c0_i32_2 = arith.constant 0 : i32
    %5 = arith.addi %1, %c0_i32_2 : i32
    %c0_3 = arith.constant 0 : index
    %6 = arith.index_cast %5 : i32 to index
    %c1 = arith.constant 1 : index
    %c0_4 = arith.constant 0 : index
    %7 = vector.load %arg2[%c0_3, %6, %c1, %c0_4] : memref<1x9x9x16xbf16, #tpu.memory_space<vmem>>, vector<1x8x8x16xbf16>
    %c1_i32 = arith.constant 1 : i32
    %8 = arith.addi %1, %c1_i32 : i32
    %c0_5 = arith.constant 0 : index
    %9 = arith.index_cast %8 : i32 to index
    %c0_6 = arith.constant 0 : index
    %c0_7 = arith.constant 0 : index
    %10 = vector.load %arg2[%c0_5, %9, %c0_6, %c0_7] : memref<1x9x9x16xbf16, #tpu.memory_space<vmem>>, vector<1x8x8x16xbf16>
    %c1_i32_8 = arith.constant 1 : i32
    %11 = arith.addi %1, %c1_i32_8 : i32
    %c0_9 = arith.constant 0 : index
    %12 = arith.index_cast %11 : i32 to index
    %c1_10 = arith.constant 1 : index
    %c0_11 = arith.constant 0 : index
    %13 = vector.load %arg2[%c0_9, %12, %c1_10, %c0_11] : memref<1x9x9x16xbf16, #tpu.memory_space<vmem>>, vector<1x8x8x16xbf16>
    %14 = tpu.concatenate %4, %7, %10, %13 in 3 : vector<1x8x8x16xbf16>, vector<1x8x8x16xbf16>, vector<1x8x8x16xbf16>, vector<1x8x8x16xbf16> -> vector<1x8x8x64xbf16>
    %15 = vector.shape_cast %14 : vector<1x8x8x64xbf16> to vector<64x64xbf16>
    %c0_12 = arith.constant 0 : index
    %c0_13 = arith.constant 0 : index
    %16 = vector.load %arg3[%c0_12, %c0_13] : memref<64x4xbf16, #tpu.memory_space<vmem>>, vector<64x4xbf16>
    %cst = arith.constant dense<0.000000e+00> : vector<64x4xf32>
    %17 = tpu.matmul %15, %16, %cst {dimension_numbers = #tpu.dot_dimension_numbers<[1], [0], [0], [1], [0, 0, 1, 1], [], []>} : vector<64x64xbf16>, vector<64x4xbf16>, vector<64x4xf32> -> vector<64x4xf32>
    %c0_14 = arith.constant 0 : index
    %c0_15 = arith.constant 0 : index
    %18 = vector.load %arg4[%c0_14, %c0_15] : memref<1x4xf32, #tpu.memory_space<vmem>>, vector<1x4xf32>
    %19 = vector.broadcast %18 : vector<1x4xf32> to vector<64x4xf32>
    %20 = arith.addf %17, %19 : vector<64x4xf32>
    %cst_16 = arith.constant 1.000000e-01 : f32
    %21 = vector.broadcast %cst_16 : f32 to vector<64x4xf32>
    %22 = arith.mulf %21, %20 : vector<64x4xf32>
    %23 = arith.maximumf %20, %22 : vector<64x4xf32>
    %24 = vector.shape_cast %23 : vector<64x4xf32> to vector<1x8x8x4xf32>
    %25 = arith.truncf %24 : vector<1x8x8x4xf32> to vector<1x8x8x4xbf16>
    %c0_17 = arith.constant 0 : index
    %c0_18 = arith.constant 0 : index
    %c0_19 = arith.constant 0 : index
    %c0_20 = arith.constant 0 : index
    %26 = vector.load %arg5[%c0_17, %c0_18, %c0_19, %c0_20] : memref<1x8x8x4xbf16, #tpu.memory_space<vmem>>, vector<1x8x8x4xbf16>
    tpu.vector_store %arg5[%c0_17, %c0_18, %c0_19, %c0_20], %25 {strides = array<i32>} : memref<1x8x8x4xbf16, #tpu.memory_space<vmem>>, vector<1x8x8x4xbf16>,
    return
  }
  func.func @transform_0(%arg0: i32, %arg1: i32) -> (i32, i32, i32, i32) {
    %c0_i32 = arith.constant 0 : i32
    %c0_i32_0 = arith.constant 0 : i32
    %c0_i32_1 = arith.constant 0 : i32
    %c0_i32_2 = arith.constant 0 : i32
    return %arg0, %c0_i32, %c0_i32_0, %c0_i32_1 : i32, i32, i32, i32
  }
  func.func @transform_1(%arg0: i32, %arg1: i32) -> (i32, i32) {
    %c0_i32 = arith.constant 0 : i32
    %c0_i32_0 = arith.constant 0 : i32
    %c0_i32_1 = arith.constant 0 : i32
    return %c0_i32, %c0_i32_0 : i32, i32
  }
  func.func @transform_2(%arg0: i32, %arg1: i32) -> (i32, i32) {
    %c0_i32 = arith.constant 0 : i32
    %c0_i32_0 = arith.constant 0 : i32
    %c0_i32_1 = arith.constant 0 : i32
    return %c0_i32, %c0_i32_0 : i32, i32
  }
  func.func @transform_3(%arg0: i32, %arg1: i32) -> (i32, i32, i32, i32) {
    %c0_i32 = arith.constant 0 : i32
    %c0_i32_0 = arith.constant 0 : i32
    %c0_i32_1 = arith.constant 0 : i32
    return %arg0, %arg1, %c0_i32, %c0_i32_0 : i32, i32, i32, i32
  }
}

module attributes {stable_mosaic.version = 11 : i64} {
  func.func @_conv_lrelu_kernel(%arg0: i32, %arg1: i32, %arg2: memref<1x9x9x16xbf16, #tpu.memory_space<vmem>>, %arg3: memref<64x4xbf16, #tpu.memory_space<vmem>>, %arg4: memref<1x4xf32, #tpu.memory_space<vmem>>, %arg5: memref<1x8x8x4xbf16, #tpu.memory_space<vmem>>) attributes {dimension_semantics = [#tpu.dimension_semantics<parallel>, #tpu.dimension_semantics<parallel>], iteration_bounds = array<i64: 2, 1>, scalar_prefetch = 0 : i64, scratch_operands = 0 : i64, tpu.core_type = #tpu.core_type<tc>, window_params = [{transform_indices = @transform_0, window_bounds = array<i64: 1, 9, 9, 16>}, {pipeline_mode = #tpu.pipeline_mode<synchronous>, transform_indices = @transform_1, window_bounds = array<i64: 64, 4>}, {pipeline_mode = #tpu.pipeline_mode<synchronous>, transform_indices = @transform_2, window_bounds = array<i64: 1, 4>}, {transform_indices = @transform_3, window_bounds = array<i64: 1, 8, 8, 4>}]} {
    %c8_i32 = arith.constant 8 : i32
    %0 = arith.muli %arg1, %c8_i32 : i32
    %1 = tpu.assume_multiple %0, 8 : i32
    %c0_i32 = arith.constant 0 : i32
    %2 = arith.addi %1, %c0_i32 : i32
    %c0 = arith.constant 0 : index
    %3 = arith.index_cast %2 : i32 to index
    %c0_0 = arith.constant 0 : index
    %c0_1 = arith.constant 0 : index
    %4 = vector.load %arg2[%c0, %3, %c0_0, %c0_1] : memref<1x9x9x16xbf16, #tpu.memory_space<vmem>>, vector<1x8x8x16xbf16>
    %c0_i32_2 = arith.constant 0 : i32
    %5 = arith.addi %1, %c0_i32_2 : i32
    %c0_3 = arith.constant 0 : index
    %6 = arith.index_cast %5 : i32 to index
    %c1 = arith.constant 1 : index
    %c0_4 = arith.constant 0 : index
    %7 = vector.load %arg2[%c0_3, %6, %c1, %c0_4] : memref<1x9x9x16xbf16, #tpu.memory_space<vmem>>, vector<1x8x8x16xbf16>
    %c1_i32 = arith.constant 1 : i32
    %8 = arith.addi %1, %c1_i32 : i32
    %c0_5 = arith.constant 0 : index
    %9 = arith.index_cast %8 : i32 to index
    %c0_6 = arith.constant 0 : index
    %c0_7 = arith.constant 0 : index
    %10 = vector.load %arg2[%c0_5, %9, %c0_6, %c0_7] : memref<1x9x9x16xbf16, #tpu.memory_space<vmem>>, vector<1x8x8x16xbf16>
    %c1_i32_8 = arith.constant 1 : i32
    %11 = arith.addi %1, %c1_i32_8 : i32
    %c0_9 = arith.constant 0 : index
    %12 = arith.index_cast %11 : i32 to index
    %c1_10 = arith.constant 1 : index
    %c0_11 = arith.constant 0 : index
    %13 = vector.load %arg2[%c0_9, %12, %c1_10, %c0_11] : memref<1x9x9x16xbf16, #tpu.memory_space<vmem>>, vector<1x8x8x16xbf16>
    %cst = arith.constant 0.000000e+00 : f32
    %14 = vector.broadcast %cst : f32 to vector<64x4xf32>
    %15 = vector.shape_cast %4 : vector<1x8x8x16xbf16> to vector<64x16xbf16>
    %c0_12 = arith.constant 0 : index
    %c0_13 = arith.constant 0 : index
    %16 = vector.load %arg3[%c0_12, %c0_13] : memref<64x4xbf16, #tpu.memory_space<vmem>>, vector<16x4xbf16>
    %cst_14 = arith.constant dense<0.000000e+00> : vector<64x4xf32>
    %17 = tpu.matmul %15, %16, %cst_14 {dimension_numbers = #tpu.dot_dimension_numbers<[1], [0], [0], [1], [0, 0, 1, 1], [], []>} : vector<64x16xbf16>, vector<16x4xbf16>, vector<64x4xf32> -> vector<64x4xf32>
    %18 = arith.addf %14, %17 : vector<64x4xf32>
    %19 = vector.shape_cast %7 : vector<1x8x8x16xbf16> to vector<64x16xbf16>
    %c16 = arith.constant 16 : index
    %c0_15 = arith.constant 0 : index
    %20 = vector.load %arg3[%c16, %c0_15] : memref<64x4xbf16, #tpu.memory_space<vmem>>, vector<16x4xbf16>
    %cst_16 = arith.constant dense<0.000000e+00> : vector<64x4xf32>
    %21 = tpu.matmul %19, %20, %cst_16 {dimension_numbers = #tpu.dot_dimension_numbers<[1], [0], [0], [1], [0, 0, 1, 1], [], []>} : vector<64x16xbf16>, vector<16x4xbf16>, vector<64x4xf32> -> vector<64x4xf32>
    %22 = arith.addf %18, %21 : vector<64x4xf32>
    %23 = vector.shape_cast %10 : vector<1x8x8x16xbf16> to vector<64x16xbf16>
    %c32 = arith.constant 32 : index
    %c0_17 = arith.constant 0 : index
    %24 = vector.load %arg3[%c32, %c0_17] : memref<64x4xbf16, #tpu.memory_space<vmem>>, vector<16x4xbf16>
    %cst_18 = arith.constant dense<0.000000e+00> : vector<64x4xf32>
    %25 = tpu.matmul %23, %24, %cst_18 {dimension_numbers = #tpu.dot_dimension_numbers<[1], [0], [0], [1], [0, 0, 1, 1], [], []>} : vector<64x16xbf16>, vector<16x4xbf16>, vector<64x4xf32> -> vector<64x4xf32>
    %26 = arith.addf %22, %25 : vector<64x4xf32>
    %27 = vector.shape_cast %13 : vector<1x8x8x16xbf16> to vector<64x16xbf16>
    %c48 = arith.constant 48 : index
    %c0_19 = arith.constant 0 : index
    %28 = vector.load %arg3[%c48, %c0_19] : memref<64x4xbf16, #tpu.memory_space<vmem>>, vector<16x4xbf16>
    %cst_20 = arith.constant dense<0.000000e+00> : vector<64x4xf32>
    %29 = tpu.matmul %27, %28, %cst_20 {dimension_numbers = #tpu.dot_dimension_numbers<[1], [0], [0], [1], [0, 0, 1, 1], [], []>} : vector<64x16xbf16>, vector<16x4xbf16>, vector<64x4xf32> -> vector<64x4xf32>
    %30 = arith.addf %26, %29 : vector<64x4xf32>
    %c0_21 = arith.constant 0 : index
    %c0_22 = arith.constant 0 : index
    %31 = vector.load %arg4[%c0_21, %c0_22] : memref<1x4xf32, #tpu.memory_space<vmem>>, vector<1x4xf32>
    %32 = vector.broadcast %31 : vector<1x4xf32> to vector<64x4xf32>
    %33 = arith.addf %30, %32 : vector<64x4xf32>
    %cst_23 = arith.constant 1.000000e-01 : f32
    %34 = vector.broadcast %cst_23 : f32 to vector<64x4xf32>
    %35 = arith.mulf %34, %33 : vector<64x4xf32>
    %36 = arith.maximumf %33, %35 : vector<64x4xf32>
    %37 = vector.shape_cast %36 : vector<64x4xf32> to vector<1x8x8x4xf32>
    %38 = arith.truncf %37 : vector<1x8x8x4xf32> to vector<1x8x8x4xbf16>
    %c0_24 = arith.constant 0 : index
    %c0_25 = arith.constant 0 : index
    %c0_26 = arith.constant 0 : index
    %c0_27 = arith.constant 0 : index
    %39 = vector.load %arg5[%c0_24, %c0_25, %c0_26, %c0_27] : memref<1x8x8x4xbf16, #tpu.memory_space<vmem>>, vector<1x8x8x4xbf16>
    tpu.vector_store %arg5[%c0_24, %c0_25, %c0_26, %c0_27], %38 {strides = array<i32>} : memref<1x8x8x4xbf16, #tpu.memory_space<vmem>>, vector<1x8x8x4xbf16>,
    return
  }
  func.func @transform_0(%arg0: i32, %arg1: i32) -> (i32, i32, i32, i32) {
    %c0_i32 = arith.constant 0 : i32
    %c0_i32_0 = arith.constant 0 : i32
    %c0_i32_1 = arith.constant 0 : i32
    %c0_i32_2 = arith.constant 0 : i32
    return %arg0, %c0_i32, %c0_i32_0, %c0_i32_1 : i32, i32, i32, i32
  }
  func.func @transform_1(%arg0: i32, %arg1: i32) -> (i32, i32) {
    %c0_i32 = arith.constant 0 : i32
    %c0_i32_0 = arith.constant 0 : i32
    %c0_i32_1 = arith.constant 0 : i32
    return %c0_i32, %c0_i32_0 : i32, i32
  }
  func.func @transform_2(%arg0: i32, %arg1: i32) -> (i32, i32) {
    %c0_i32 = arith.constant 0 : i32
    %c0_i32_0 = arith.constant 0 : i32
    %c0_i32_1 = arith.constant 0 : i32
    return %c0_i32, %c0_i32_0 : i32, i32
  }
  func.func @transform_3(%arg0: i32, %arg1: i32) -> (i32, i32, i32, i32) {
    %c0_i32 = arith.constant 0 : i32
    %c0_i32_0 = arith.constant 0 : i32
    %c0_i32_1 = arith.constant 0 : i32
    return %arg0, %arg1, %c0_i32, %c0_i32_0 : i32, i32, i32, i32
  }
}

</mosaic_0001>

<llo_original>
// kernel: tpu_custom_call.1
$region0: #{tpu_custom_call.1}
  #allocation0 [shape = 'u32[]', space=smem, size = 0x4, offset = 0x4, fixed_abs, tag = 'smem constant byte address 0x4 - core index']
  #allocation1 [shape = 'u32[144,128]{1,0:T(1,128)}', space=vmem, size = 0x12000, scoped, tag = 'internal scratch']
  %s0 = inlined_call_operand.vmem [shape: bf16[2,9,9,16], index: 0, kind: input, shape index: {}]
  %s1 = inlined_call_operand.vmem [shape: bf16[64,4], index: 1, kind: input, shape index: {}]
  %s2 = inlined_call_operand.vmem [shape: f32[1,4], index: 2, kind: input, shape index: {}]
  %s3 = inlined_call_operand.vmem [shape: bf16[2,8,8,4], index: 3, kind: output, shape index: {}]
  %s4 = sld [smem:[#allocation0]]
  $region45: #{tpu_custom_call.1} parent=0
    _
  %s6 = ssub.s32 1, %s4
  %s7 = scalar_select 0, %s6, %s4
  loop: start=0, step=1, limit=4
  $region2: #{tpu_custom_call.1} parent=0 // loop_pre_header
    _
  $region3: #{tpu_custom_call.1} parent=0 // loop_header
    %s9 = sphi 0, %s13
    %p10 = scmp.ge.s32.totalorder %s9, 4
    %s16 = sphi 0, %s28
    %s17 = sphi 0, %s24
    %s18 = sphi 0, %s16
    %s19 = sphi 0, %s17
    %s20 = sphi 0, %s18
    %s21 = sphi 0, %s19
    %s31 = sphi 0, %s33
    %s34 = sphi 0, %s31
    %s35 = sphi 0, %s34
    %s51 = sphi 0, %s35
    %s55 = sphi 0, %s55
    %s57 = sphi 0, %s55
    %s58 = sphi 0, %s57
    %s72 = sphi 0, %s58
    %s76 = sphi 0, %s76
    %s78 = sphi 0, %s76
    %s79 = sphi 0, %s78
    %s93 = sphi 0, %s79
    %s101 = sphi 0, %s103
    %s104 = sphi 0, %s101
    %s105 = sphi 0, %s104
    %s121 = sphi 0, %s105
  $region4: #{tpu_custom_call.1} parent=0 // loop_header_branch
    %12 = sbr.rel (%p10) target = $region8
  $region5: #{tpu_custom_call.1} parent=0 // loop_body
    %s14 = ssub.s32 %s9, 1
    %s15 = ssub.s32 %s9, 2
    %s22 = sadd.s32 1, %s17
    %p23 = scmp.ge.s32.totalorder %s22, 1
    %s24 = scalar_select %p23, 0, %s22
    %s25 = sadd.s32 1, %s16
    %s26 = scalar_select %p23, %s25, %s16
    %p27 = scmp.ge.s32.totalorder %s26, 2
    %s28 = scalar_select %p27, 0, %s26
    %s29 = ssub.s32 %s16, %s28
    %p30 = scmp.eq.s32.totalorder %s29, 0
    %s32 = sadd.s32 %s31, 1
    %s33 = scalar_select %p30, %s31, %s32
    %p36 = pneg %p30
    %p37 = scmp.eq.s32.totalorder %s9, 1
    %p38 = por %p36, %p37
    %p39 = scmp.ne.s32.totalorder %s31, %s34
    %p40 = scmp.eq.s32.totalorder %s9, 0
    %p41 = por %p39, %p40
    %p42 = scmp.ne.s32.totalorder %s31, %s34
    %p43 = scmp.eq.s32.totalorder %s14, 1
    %p44 = por %p42, %p43
    %p45 = scmp.ne.s32.totalorder %s34, %s35
    %p46 = scmp.eq.s32.totalorder %s14, 0
    %p47 = por %p45, %p46
    %p48 = scmp.ne.s32.totalorder %s34, %s35
    %p49 = scmp.eq.s32.totalorder %s15, 1
    %p50 = por %p48, %p49
    %p52 = scmp.ne.s32.totalorder %s35, %s51
    %p53 = scmp.eq.s32.totalorder %s15, 0
    %p54 = por %p52, %p53
    %s56 = sadd.s32 %s55, 1
    %p59 = scmp.eq.s32.totalorder %s9, 1
    %p60 = scmp.ne.s32.totalorder %s55, %s57
    %p61 = scmp.eq.s32.totalorder %s9, 0
    %p62 = por %p60, %p61
    %p63 = scmp.ne.s32.totalorder %s55, %s57
    %p64 = scmp.eq.s32.totalorder %s14, 1
    %p65 = por %p63, %p64
    %p66 = scmp.ne.s32.totalorder %s57, %s58
    %p67 = scmp.eq.s32.totalorder %s14, 0
    %p68 = por %p66, %p67
    %p69 = scmp.ne.s32.totalorder %s57, %s58
    %p70 = scmp.eq.s32.totalorder %s15, 1
    %p71 = por %p69, %p70
    %p73 = scmp.ne.s32.totalorder %s58, %s72
    %p74 = scmp.eq.s32.totalorder %s15, 0
    %p75 = por %p73, %p74
    %s77 = sadd.s32 %s76, 1
    %p80 = scmp.eq.s32.totalorder %s9, 1
    %p81 = scmp.ne.s32.totalorder %s76, %s78
    %p82 = scmp.eq.s32.totalorder %s9, 0
    %p83 = por %p81, %p82
    %p84 = scmp.ne.s32.totalorder %s76, %s78
    %p85 = scmp.eq.s32.totalorder %s14, 1
    %p86 = por %p84, %p85
    %p87 = scmp.ne.s32.totalorder %s78, %s79
    %p88 = scmp.eq.s32.totalorder %s14, 0
    %p89 = por %p87, %p88
    %p90 = scmp.ne.s32.totalorder %s78, %s79
    %p91 = scmp.eq.s32.totalorder %s15, 1
    %p92 = por %p90, %p91
    %p94 = scmp.ne.s32.totalorder %s79, %s93
    %p95 = scmp.eq.s32.totalorder %s15, 0
    %p96 = por %p94, %p95
    %s97 = ssub.s32 %s16, %s28
    %s98 = ssub.s32 %s17, %s24
    %s99 = sor.u32 %s97, %s98
    %p100 = scmp.eq.s32.totalorder %s99, 0
    %s102 = sadd.s32 %s101, 1
    %s103 = scalar_select %p100, %s101, %s102
    %p106 = pneg %p100
    %p107 = scmp.eq.s32.totalorder %s9, 1
    %p108 = por %p106, %p107
    %p109 = scmp.ne.s32.totalorder %s101, %s104
    %p110 = scmp.eq.s32.totalorder %s9, 0
    %p111 = por %p109, %p110
    %p112 = scmp.ne.s32.totalorder %s101, %s104
    %p113 = scmp.eq.s32.totalorder %s14, 1
    %p114 = por %p112, %p113
    %p115 = scmp.ne.s32.totalorder %s104, %s105
    %p116 = scmp.eq.s32.totalorder %s14, 0
    %p117 = por %p115, %p116
    %p118 = scmp.ne.s32.totalorder %s104, %s105
    %p119 = scmp.eq.s32.totalorder %s15, 1
    %p120 = por %p118, %p119
    %p122 = scmp.ne.s32.totalorder %s105, %s121
    %p123 = scmp.eq.s32.totalorder %s15, 0
    %p124 = por %p122, %p123
    %p125 = scmp.le.s32.totalorder 1, %s9
    %p126 = scmp.lt.s32.totalorder %s9, 3
    %p127 = pnand %p125, %p126
    %p128 = pneg %p127
    // Predicated region
    $region9: #{tpu_custom_call.1} parent=5 // pred_check
      _
    $region10: #{tpu_custom_call.1} parent=5 // pred_check_branch
      %130 = sbr.rel (%p127) target = $region12
    $region11: #{tpu_custom_call.1} parent=5 // pred_region
      %s131 = ssub.s32 %s9, 1
      // Predicated region
      $region13: #{tpu_custom_call.1} parent=11 // pred_check
        %p132 = pneg %p68
      $region14: #{tpu_custom_call.1} parent=11 // pred_check_branch
        %134 = sbr.rel (%p132) target = $region16
      $region15: #{tpu_custom_call.1} parent=11 // pred_region
        _
      $region16: #{tpu_custom_call.1} parent=11 // pred_fallthru
        _
      // Predicated region
      $region17: #{tpu_custom_call.1} parent=11 // pred_check
        %p135 = pneg %p89
      $region18: #{tpu_custom_call.1} parent=11 // pred_check_branch
        %137 = sbr.rel (%p135) target = $region20
      $region19: #{tpu_custom_call.1} parent=11 // pred_region
        _
      $region20: #{tpu_custom_call.1} parent=11 // pred_fallthru
        _
    $region12: #{tpu_custom_call.1} parent=5 // pred_fallthru
      _
    %p138 = scmp.lt.s32.totalorder %s9, 2
    // Predicated region
    $region21: #{tpu_custom_call.1} parent=5 // pred_check
      %p139 = pneg %p138
    $region22: #{tpu_custom_call.1} parent=5 // pred_check_branch
      %141 = sbr.rel (%p139) target = $region24
    $region23: #{tpu_custom_call.1} parent=5 // pred_region
      // Predicated region
      $region25: #{tpu_custom_call.1} parent=23 // pred_check
        %p142 = pneg %p41
      $region26: #{tpu_custom_call.1} parent=23 // pred_check_branch
        %144 = sbr.rel (%p142) target = $region28
      $region27: #{tpu_custom_call.1} parent=23 // pred_region
        %p145 = scmp.lt.s32.totalorder %s16, 1
        %s146 = scalar_select %p145, %s16, 1
        %s147 = smul.addr %s146, 18
        %s148 = smul.addr %s147, 4
        %s149 = scalar_lea.vmem %s0, %s148
      $region28: #{tpu_custom_call.1} parent=23 // pred_fallthru
        _
    $region24: #{tpu_custom_call.1} parent=5 // pred_fallthru
      _
    %p150 = scmp.le.s32.totalorder 1, %s9
    %p151 = scmp.lt.s32.totalorder %s9, 3
    %p152 = pnand %p150, %p151
    %p153 = pneg %p152
    // Predicated region
    $region29: #{tpu_custom_call.1} parent=5 // pred_check
      _
    $region30: #{tpu_custom_call.1} parent=5 // pred_check_branch
      %155 = sbr.rel (%p152) target = $region32
    $region31: #{tpu_custom_call.1} parent=5 // pred_region
      %s156 = ssub.s32 %s9, 1
      %p157 = scmp.lt.s32.totalorder %s18, 1
      %s158 = scalar_select %p157, %s18, 1
      %s159 = smul.addr %s158, 18
      %s160 = smul.addr %s159, 4
      %s161 = scalar_lea.vmem %s0, %s160
      %p162 = pneg %p47
      %p163 = pneg %p44
      %p164 = pneg %p68
      %p165 = pneg %p65
      %p166 = pneg %p89
      %p167 = pneg %p86
      %p168 = pneg %p117
      %p169 = pneg %p114
      %s170 = smul.u32 8, %s19
      %p171 = scmp.lt.s32.totalorder %s18, 1
      %s172 = scalar_select %p171, %s18, 1
      %p173 = scmp.lt.s32.totalorder %s170, 7
      %s174 = scalar_select %p173, %s170, 7
      %s175 = smul.addr %s172, 8
      %s176 = sadd.s32 %s174, %s175
      %s177 = smul.addr %s176, 4
      %s178 = scalar_lea.vmem %s3, %s177
      %p179 = scmp.lt.s32.totalorder %s18, 1
      %s180 = scalar_select %p179, %s18, 1
      %s181 = smul.addr %s180, 18
      %s182 = smul.addr %s181, 4
      %s183 = scalar_lea.vmem %s0, %s182
      %s184 = smul.u32 8, %s19
      %p185 = scmp.lt.s32.totalorder %s18, 1
      %s186 = scalar_select %p185, %s18, 1
      %p187 = scmp.lt.s32.totalorder %s184, 7
      %s188 = scalar_select %p187, %s184, 7
      %s189 = smul.addr %s186, 8
      %s190 = sadd.s32 %s188, %s189
      %s191 = smul.addr %s190, 4
      %s192 = scalar_lea.vmem %s3, %s191
      %s193 = smul.u32 8, %s19
      %s195 = smul.u32 %s19, 8
      %s196 = smul.u32 %s195, 2
      %s197 = smul.addr %s196, 4
      %s198 = scalar_lea.vmem %s183, %s197
      %v199 = vld [vmem:[%s198] sm:$0xf]
      %v200 = vld [vmem:[%s198 + $0x8] sm:$0xf]
      %v201 = vld [vmem:[%s198 + $0x10] sm:$0xf]
      %v202 = vld [vmem:[%s198 + $0x18] sm:$0xf]
      %v203 = vld [vmem:[%s198 + $0x20] sm:$0xf]
      %v204 = vld [vmem:[%s198 + $0x28] sm:$0xf]
      %v205 = vld [vmem:[%s198 + $0x30] sm:$0xf]
      %v206 = vld [vmem:[%s198 + $0x38] sm:$0xf]
      %v207 = vld [vmem:[%s198 + $0x4] sm:$0x1]
      %v208 = vld [vmem:[%s198 + $0xc] sm:$0x1]
      %v209 = vld [vmem:[%s198 + $0x14] sm:$0x1]
      %v210 = vld [vmem:[%s198 + $0x1c] sm:$0x1]
      %v211 = vld [vmem:[%s198 + $0x24] sm:$0x1]
      %v212 = vld [vmem:[%s198 + $0x2c] sm:$0x1]
      %v213 = vld [vmem:[%s198 + $0x34] sm:$0x1]
      %v214 = vld [vmem:[%s198 + $0x3c] sm:$0x1]
      %s215 = sadd.s32 %s195, 1
      %s216 = smul.u32 %s215, 2
      %s217 = smul.addr %s216, 4
      %s218 = scalar_lea.vmem %s183, %s217
      %v219 = vld [vmem:[%s218] sm:$0xf]
      %v220 = vld [vmem:[%s218 + $0x8] sm:$0xf]
      %v221 = vld [vmem:[%s218 + $0x10] sm:$0xf]
      %v222 = vld [vmem:[%s218 + $0x18] sm:$0xf]
      %v223 = vld [vmem:[%s218 + $0x20] sm:$0xf]
      %v224 = vld [vmem:[%s218 + $0x28] sm:$0xf]
      %v225 = vld [vmem:[%s218 + $0x30] sm:$0xf]
      %v226 = vld [vmem:[%s218 + $0x38] sm:$0xf]
      %v227 = vld [vmem:[%s218 + $0x4] sm:$0x1]
      %v228 = vld [vmem:[%s218 + $0xc] sm:$0x1]
      %v229 = vld [vmem:[%s218 + $0x14] sm:$0x1]
      %v230 = vld [vmem:[%s218 + $0x1c] sm:$0x1]
      %v231 = vld [vmem:[%s218 + $0x24] sm:$0x1]
      %v232 = vld [vmem:[%s218 + $0x2c] sm:$0x1]
      %v233 = vld [vmem:[%s218 + $0x34] sm:$0x1]
      %v234 = vld [vmem:[%s218 + $0x3c] sm:$0x1]
      %v251 = vunpack.c.l.b16 %v199
      %v252 = vunpack.c.l.b16 %v207
      %v253 = vunpack.c.l.b16 %v200
      %v254 = vunpack.c.l.b16 %v208
      %v255 = vunpack.c.l.b16 %v201
      %v256 = vunpack.c.l.b16 %v209
      %v257 = vunpack.c.l.b16 %v202
      %v258 = vunpack.c.l.b16 %v210
      %v259 = vunpack.c.l.b16 %v203
      %v260 = vunpack.c.l.b16 %v211
      %v261 = vunpack.c.l.b16 %v204
      %v262 = vunpack.c.l.b16 %v212
      %v263 = vunpack.c.l.b16 %v205
      %v264 = vunpack.c.l.b16 %v213
      %v265 = vunpack.c.l.b16 %v206
      %v266 = vunpack.c.l.b16 %v214
      %v267 = vpack.c.b16 %v252, %v251
      %v268 = vpack.c.b16 %v254, %v253
      %v269 = vpack.c.b16 %v256, %v255
      %v270 = vpack.c.b16 %v258, %v257
      %v271 = vpack.c.b16 %v260, %v259
      %v272 = vpack.c.b16 %v262, %v261
      %v273 = vpack.c.b16 %v264, %v263
      %v274 = vpack.c.b16 %v266, %v265
      %v276 = vshrl.u32 %v267, 16
      %v278 = vshll.u32 %v267, 16
      %v280 = vrot.slane %v278, 1
      %v281 = vor.u32 %v276, %v280
      %v283 = vshrl.u32 %v268, 16
      %v285 = vshll.u32 %v268, 16
      %v287 = vrot.slane %v285, 1
      %v288 = vor.u32 %v283, %v287
      %v290 = vshrl.u32 %v269, 16
      %v292 = vshll.u32 %v269, 16
      %v294 = vrot.slane %v292, 1
      %v295 = vor.u32 %v290, %v294
      %v297 = vshrl.u32 %v270, 16
      %v299 = vshll.u32 %v270, 16
      %v301 = vrot.slane %v299, 1
      %v302 = vor.u32 %v297, %v301
      %v304 = vshrl.u32 %v271, 16
      %v306 = vshll.u32 %v271, 16
      %v308 = vrot.slane %v306, 1
      %v309 = vor.u32 %v304, %v308
      %v311 = vshrl.u32 %v272, 16
      %v313 = vshll.u32 %v272, 16
      %v315 = vrot.slane %v313, 1
      %v316 = vor.u32 %v311, %v315
      %v318 = vshrl.u32 %v273, 16
      %v320 = vshll.u32 %v273, 16
      %v322 = vrot.slane %v320, 1
      %v323 = vor.u32 %v318, %v322
      %v325 = vshrl.u32 %v274, 16
      %v327 = vshll.u32 %v274, 16
      %v329 = vrot.slane %v327, 1
      %v330 = vor.u32 %v325, %v329
      %331 = vrot.lane.b32.xlu0 %v281, 16
      %v332 = vpop.permute.xlu0 %331
      %333 = vrot.lane.b32.xlu0 %v288, 16
      %v334 = vpop.permute.xlu0 %333
      %335 = vrot.lane.b32.xlu0 %v295, 16
      %v336 = vpop.permute.xlu0 %335
      %337 = vrot.lane.b32.xlu0 %v302, 16
      %v338 = vpop.permute.xlu0 %337
      %339 = vrot.lane.b32.xlu0 %v309, 16
      %v340 = vpop.permute.xlu0 %339
      %341 = vrot.lane.b32.xlu0 %v316, 16
      %v342 = vpop.permute.xlu0 %341
      %343 = vrot.lane.b32.xlu0 %v323, 16
      %v344 = vpop.permute.xlu0 %343
      %345 = vrot.lane.b32.xlu0 %v330, 16
      %v346 = vpop.permute.xlu0 %345
      %v355 = vunpack.c.l.b16 %v219
      %v356 = vunpack.c.l.b16 %v220
      %v357 = vunpack.c.l.b16 %v221
      %v358 = vunpack.c.l.b16 %v222
      %v359 = vunpack.c.l.b16 %v223
      %v360 = vunpack.c.l.b16 %v224
      %v361 = vunpack.c.l.b16 %v225
      %v362 = vunpack.c.l.b16 %v226
      %v363 = vpack.c.b16 %v355, %v355
      %v364 = vpack.c.b16 %v356, %v356
      %v365 = vpack.c.b16 %v357, %v357
      %v366 = vpack.c.b16 %v358, %v358
      %v367 = vpack.c.b16 %v359, %v359
      %v368 = vpack.c.b16 %v360, %v360
      %v369 = vpack.c.b16 %v361, %v361
      %v370 = vpack.c.b16 %v362, %v362
      %371 = vrot.lane.b32.xlu0 %v363, 32
      %v372 = vpop.permute.xlu0 %371
      %373 = vrot.lane.b32.xlu0 %v364, 32
      %v374 = vpop.permute.xlu0 %373
      %375 = vrot.lane.b32.xlu0 %v365, 32
      %v376 = vpop.permute.xlu0 %375
      %377 = vrot.lane.b32.xlu0 %v366, 32
      %v378 = vpop.permute.xlu0 %377
      %379 = vrot.lane.b32.xlu0 %v367, 32
      %v380 = vpop.permute.xlu0 %379
      %381 = vrot.lane.b32.xlu0 %v368, 32
      %v382 = vpop.permute.xlu0 %381
      %383 = vrot.lane.b32.xlu0 %v369, 32
      %v384 = vpop.permute.xlu0 %383
      %385 = vrot.lane.b32.xlu0 %v370, 32
      %v386 = vpop.permute.xlu0 %385
      %v395 = vunpack.c.l.b16 %v227
      %v396 = vunpack.c.l.b16 %v228
      %v397 = vunpack.c.l.b16 %v229
      %v398 = vunpack.c.l.b16 %v230
      %v399 = vunpack.c.l.b16 %v231
      %v400 = vunpack.c.l.b16 %v232
      %v401 = vunpack.c.l.b16 %v233
      %v402 = vunpack.c.l.b16 %v234
      %v403 = vpack.c.b16 %v395, %v355
      %v404 = vpack.c.b16 %v396, %v356
      %v405 = vpack.c.b16 %v397, %v357
      %v406 = vpack.c.b16 %v398, %v358
      %v407 = vpack.c.b16 %v399, %v359
      %v408 = vpack.c.b16 %v400, %v360
      %v409 = vpack.c.b16 %v401, %v361
      %v410 = vpack.c.b16 %v402, %v362
      %v412 = vshrl.u32 %v403, 16
      %v414 = vshll.u32 %v403, 16
      %v416 = vrot.slane %v414, 1
      %v417 = vor.u32 %v412, %v416
      %v419 = vshrl.u32 %v404, 16
      %v421 = vshll.u32 %v404, 16
      %v423 = vrot.slane %v421, 1
      %v424 = vor.u32 %v419, %v423
      %v426 = vshrl.u32 %v405, 16
      %v428 = vshll.u32 %v405, 16
      %v430 = vrot.slane %v428, 1
      %v431 = vor.u32 %v426, %v430
      %v433 = vshrl.u32 %v406, 16
      %v435 = vshll.u32 %v406, 16
      %v437 = vrot.slane %v435, 1
      %v438 = vor.u32 %v433, %v437
      %v440 = vshrl.u32 %v407, 16
      %v442 = vshll.u32 %v407, 16
      %v444 = vrot.slane %v442, 1
      %v445 = vor.u32 %v440, %v444
      %v447 = vshrl.u32 %v408, 16
      %v449 = vshll.u32 %v408, 16
      %v451 = vrot.slane %v449, 1
      %v452 = vor.u32 %v447, %v451
      %v454 = vshrl.u32 %v409, 16
      %v456 = vshll.u32 %v409, 16
      %v458 = vrot.slane %v456, 1
      %v459 = vor.u32 %v454, %v458
      %v461 = vshrl.u32 %v410, 16
      %v463 = vshll.u32 %v410, 16
      %v465 = vrot.slane %v463, 1
      %v466 = vor.u32 %v461, %v465
      %467 = vrot.lane.b32.xlu0 %v417, 48
      %v468 = vpop.permute.xlu0 %467
      %469 = vrot.lane.b32.xlu0 %v424, 48
      %v470 = vpop.permute.xlu0 %469
      %471 = vrot.lane.b32.xlu0 %v431, 48
      %v472 = vpop.permute.xlu0 %471
      %473 = vrot.lane.b32.xlu0 %v438, 48
      %v474 = vpop.permute.xlu0 %473
      %475 = vrot.lane.b32.xlu0 %v445, 48
      %v476 = vpop.permute.xlu0 %475
      %477 = vrot.lane.b32.xlu0 %v452, 48
      %v478 = vpop.permute.xlu0 %477
      %479 = vrot.lane.b32.xlu0 %v459, 48
      %v480 = vpop.permute.xlu0 %479
      %481 = vrot.lane.b32.xlu0 %v466, 48
      %v482 = vpop.permute.xlu0 %481
      %vm483 = vcmask 130048
      %v486 = vsel %vm483, %v199, %v332
      %v489 = vsel %vm483, %v200, %v334
      %v492 = vsel %vm483, %v201, %v336
      %v495 = vsel %vm483, %v202, %v338
      %v498 = vsel %vm483, %v203, %v340
      %v501 = vsel %vm483, %v204, %v342
      %v504 = vsel %vm483, %v205, %v344
      %v507 = vsel %vm483, %v206, %v346
      %vm508 = vcmask 261120
      %v510 = vsel %vm508, %v486, %v372
      %v512 = vsel %vm508, %v489, %v374
      %v514 = vsel %vm508, %v492, %v376
      %v516 = vsel %vm508, %v495, %v378
      %v518 = vsel %vm508, %v498, %v380
      %v520 = vsel %vm508, %v501, %v382
      %v522 = vsel %vm508, %v504, %v384
      %v524 = vsel %vm508, %v507, %v386
      %vm525 = vcmask 392192
      %v527 = vsel %vm525, %v510, %v468
      %v529 = vsel %vm525, %v512, %v470
      %v531 = vsel %vm525, %v514, %v472
      %v533 = vsel %vm525, %v516, %v474
      %v535 = vsel %vm525, %v518, %v476
      %v537 = vsel %vm525, %v520, %v478
      %v539 = vsel %vm525, %v522, %v480
      %v541 = vsel %vm525, %v524, %v482
      %v542 = vld [vmem:[%s1] sm:$0xf]
      %v543 = vld [vmem:[%s1 + $0x4] sm:$0xf]
      %v544 = vld [vmem:[%s1 + $0x8] sm:$0xf]
      %v545 = vld [vmem:[%s1 + $0xc] sm:$0xf]
      %v546 = vld [vmem:[%s1 + $0x10] sm:$0xf]
      %v547 = vld [vmem:[%s1 + $0x14] sm:$0xf]
      %v548 = vld [vmem:[%s1 + $0x18] sm:$0xf]
      %v549 = vld [vmem:[%s1 + $0x1c] sm:$0xf]
      %v550 = vld [vmem:[%s2] sm:$0x1]
      %v552 = vlaneseq
      %v553 = vshrl.u32 %v552, 7
      %v554 = vsub.s32 0, %v553
      %v555 = vrot.slane %v550, %v554
      %v565 = vunpack.c.l.b16 %v527
      %v566 = vunpack.c.l.b16 %v529
      %v567 = vunpack.c.l.b16 %v531
      %v568 = vunpack.c.l.b16 %v533
      %v569 = vunpack.c.l.b16 %v535
      %v570 = vunpack.c.l.b16 %v537
      %v571 = vunpack.c.l.b16 %v539
      %v572 = vunpack.c.l.b16 %v541
      %v573 = vpack.c.b16 %v566, %v565
      %v574 = vpack.c.b16 %v568, %v567
      %v575 = vpack.c.b16 %v570, %v569
      %v576 = vpack.c.b16 %v572, %v571
      %v585 = vunpack.c.l.b16 %v542
      %v586 = vunpack.c.l.b16 %v543
      %v587 = vunpack.c.l.b16 %v544
      %v588 = vunpack.c.l.b16 %v545
      %v589 = vunpack.c.l.b16 %v546
      %v590 = vunpack.c.l.b16 %v547
      %v591 = vunpack.c.l.b16 %v548
      %v592 = vunpack.c.l.b16 %v549
      %v593 = vpack.c.b16 %v586, %v585
      %v594 = vpack.c.b16 %v588, %v587
      %v595 = vpack.c.b16 %v590, %v589
      %v596 = vpack.c.b16 %v592, %v591
      %vm601 = vcmask 523264
      %v603 = vsel %vm601, %v573, 0
      %v606 = vsel %vm601, %v574, 0
      %v609 = vsel %vm601, %v575, 0
      %v612 = vsel %vm601, %v576, 0
      %614 = vmatprep.subr.bf16.mxu0 0
      %615 = vmatpush1.bf16.msra.mxu0 %v593
      %616 = vmatprep.subr.bf16.mxu0 0
      %617 = vmatpush1.bf16.msra.mxu0 %v594
      %618 = vmatprep.subr.bf16.mxu0 0
      %619 = vmatpush1.bf16.msra.mxu0 %v595
      %620 = vmatprep.subr.bf16.mxu0 0
      %621 = vmatpush1.bf16.msra.mxu0 %v596
      %622 = vmatprep.subr.bf16.mxu0 0
      %623 = vmatpush1.bf16.msra.mxu0 0
      %624 = vmatprep.subr.bf16.mxu0 0
      %625 = vmatpush1.bf16.msra.mxu0 0
      %626 = vmatprep.subr.bf16.mxu0 0
      %627 = vmatpush1.bf16.msra.mxu0 0
      %628 = vmatprep.subr.bf16.mxu0 0
      %629 = vmatpush1.bf16.msra.mxu0 0
      %630 = vmatprep.subr.bf16.mxu0 0
      %631 = vmatpush1.bf16.msra.mxu0 0
      %632 = vmatprep.subr.bf16.mxu0 0
      %633 = vmatpush1.bf16.msra.mxu0 0
      %634 = vmatprep.subr.bf16.mxu0 0
      %635 = vmatpush1.bf16.msra.mxu0 0
      %636 = vmatprep.subr.bf16.mxu0 0
      %637 = vmatpush1.bf16.msra.mxu0 0
      %638 = vmatprep.subr.bf16.mxu0 0
      %639 = vmatpush1.bf16.msra.mxu0 0
      %640 = vmatprep.subr.bf16.mxu0 0
      %641 = vmatpush1.bf16.msra.mxu0 0
      %642 = vmatprep.subr.bf16.mxu0 0
      %643 = vmatpush1.bf16.msra.mxu0 0
      %644 = vmatprep.subr.bf16.mxu0 0
      %645 = vmatpush1.bf16.msra.mxu0 0
      %646 = vmatprep.mubr.bf16.mxu0 0
      %647 = vmatmul.mubr.bf16.gmra.mrb[0].mxu0 %v603
      %v648 = vpop.f32.mrb[0].mxu0
      %v649 = vadd.f32 %v555, %v648
      %v650 = vpop.f32.mrb[0].mxu0
      %v651 = vpop.f32.mrb[0].mxu0
      %v652 = vadd.f32 %v555, %v651
      %v653 = vpop.f32.mrb[0].mxu0
      %654 = vmatprep.mubr.bf16.mxu0 0
      %655 = vmatmul.mubr.bf16.gmra.mrb[0].mxu0 %v606
      %v656 = vpop.f32.mrb[0].mxu0
      %v657 = vadd.f32 %v555, %v656
      %v658 = vpop.f32.mrb[0].mxu0
      %v659 = vpop.f32.mrb[0].mxu0
      %v660 = vadd.f32 %v555, %v659
      %v661 = vpop.f32.mrb[0].mxu0
      %662 = vmatprep.mubr.bf16.mxu0 0
      %663 = vmatmul.mubr.bf16.gmra.mrb[0].mxu0 %v609
      %v664 = vpop.f32.mrb[0].mxu0
      %v665 = vadd.f32 %v555, %v664
      %v666 = vpop.f32.mrb[0].mxu0
      %v667 = vpop.f32.mrb[0].mxu0
      %v668 = vadd.f32 %v555, %v667
      %v669 = vpop.f32.mrb[0].mxu0
      %670 = vmatprep.mubr.bf16.mxu0 0
      %671 = vmatmul.mubr.bf16.gmra.mrb[0].mxu0 %v612
      %v672 = vpop.f32.mrb[0].mxu0
      %v673 = vadd.f32 %v555, %v672
      %v674 = vpop.f32.mrb[0].mxu0
      %v675 = vpop.f32.mrb[0].mxu0
      %v676 = vadd.f32 %v555, %v675
      %v677 = vpop.f32.mrb[0].mxu0
      %678 = vdwg.mxu0
      %v679 = vmul.f32 %v649, 0.1
      %v680 = vmul.f32 %v652, 0.1
      %v681 = vmul.f32 %v657, 0.1
      %v682 = vmul.f32 %v660, 0.1
      %v683 = vmul.f32 %v665, 0.1
      %v684 = vmul.f32 %v668, 0.1
      %v685 = vmul.f32 %v673, 0.1
      %v686 = vmul.f32 %v676, 0.1
      %v687 = vmax.f32 %v649, %v679
      %v688 = vmax.f32 %v652, %v680
      %v689 = vmax.f32 %v657, %v681
      %v690 = vmax.f32 %v660, %v682
      %v691 = vmax.f32 %v665, %v683
      %v692 = vmax.f32 %v668, %v684
      %v693 = vmax.f32 %v673, %v685
      %v694 = vmax.f32 %v676, %v686
      %v695 = vpack.c.bf16 %v687, %v687
      %v696 = vpack.c.bf16 %v688, %v688
      %v697 = vpack.c.bf16 %v689, %v689
      %v698 = vpack.c.bf16 %v690, %v690
      %v699 = vpack.c.bf16 %v691, %v691
      %v700 = vpack.c.bf16 %v692, %v692
      %v701 = vpack.c.bf16 %v693, %v693
      %v702 = vpack.c.bf16 %v694, %v694
      %vm703 = vcmask 27648
      %704 = vst.msk [vmem:[%s192] sm:$0xf] %vm703, %v695
      %705 = vst.msk [vmem:[%s192 + $0x4] sm:$0xf] %vm703, %v696
      %706 = vst.msk [vmem:[%s192 + $0x8] sm:$0xf] %vm703, %v697
      %707 = vst.msk [vmem:[%s192 + $0xc] sm:$0xf] %vm703, %v698
      %708 = vst.msk [vmem:[%s192 + $0x10] sm:$0xf] %vm703, %v699
      %709 = vst.msk [vmem:[%s192 + $0x14] sm:$0xf] %vm703, %v700
      %710 = vst.msk [vmem:[%s192 + $0x18] sm:$0xf] %vm703, %v701
      %711 = vst.msk [vmem:[%s192 + $0x1c] sm:$0xf] %vm703, %v702
      %s712 = smul.u32 8, %s19
      %p713 = scmp.lt.s32.totalorder %s18, 1
      %s714 = scalar_select %p713, %s18, 1
      %p715 = scmp.lt.s32.totalorder %s712, 7
      %s716 = scalar_select %p715, %s712, 7
      %s717 = smul.addr %s714, 8
      %s718 = sadd.s32 %s716, %s717
      %s719 = smul.addr %s718, 4
      %s720 = scalar_lea.vmem %s3, %s719
      // Predicated region
      $region33: #{tpu_custom_call.1} parent=31 // pred_check
        %p721 = pneg %p114
      $region34: #{tpu_custom_call.1} parent=31 // pred_check_branch
        %723 = sbr.rel (%p721) target = $region36
      $region35: #{tpu_custom_call.1} parent=31 // pred_region
        %s724 = smul.u32 8, %s19
      $region36: #{tpu_custom_call.1} parent=31 // pred_fallthru
        _
    $region32: #{tpu_custom_call.1} parent=5 // pred_fallthru
      _
    %p725 = scmp.le.s32.totalorder 2, %s9
    // Predicated region
    $region37: #{tpu_custom_call.1} parent=5 // pred_check
      %p726 = pneg %p725
    $region38: #{tpu_custom_call.1} parent=5 // pred_check_branch
      %728 = sbr.rel (%p726) target = $region40
    $region39: #{tpu_custom_call.1} parent=5 // pred_region
      %s729 = ssub.s32 %s9, 2
      // Predicated region
      $region41: #{tpu_custom_call.1} parent=39 // pred_check
        %p730 = pneg %p120
      $region42: #{tpu_custom_call.1} parent=39 // pred_check_branch
        %732 = sbr.rel (%p730) target = $region44
      $region43: #{tpu_custom_call.1} parent=39 // pred_region
        %s733 = smul.u32 8, %s21
        %p734 = scmp.lt.s32.totalorder %s20, 1
        %s735 = scalar_select %p734, %s20, 1
        %p736 = scmp.lt.s32.totalorder %s733, 7
        %s737 = scalar_select %p736, %s733, 7
        %s738 = smul.addr %s735, 8
        %s739 = sadd.s32 %s737, %s738
        %s740 = smul.addr %s739, 4
        %s741 = scalar_lea.vmem %s3, %s740
      $region44: #{tpu_custom_call.1} parent=39 // pred_fallthru
        _
    $region40: #{tpu_custom_call.1} parent=5 // pred_fallthru
      _
  $region6: #{tpu_custom_call.1} parent=0 // loop_footer
    %s13 = sadd.s32 1, %s9
  $region7: #{tpu_custom_call.1} parent=0 // loop_footer_branch
    %8 = sbr.rel target = $region3
  $region8: #{tpu_custom_call.1} parent=0 // loop_exit
    _

// kernel: tpu_custom_call.1
$region0: #{tpu_custom_call.1}
  #allocation0 [shape = 'u32[]', space=smem, size = 0x4, offset = 0x4, fixed_abs, tag = 'smem constant byte address 0x4 - core index']
  #allocation1 [shape = 'u32[144,128]{1,0:T(1,128)}', space=vmem, size = 0x12000, scoped, tag = 'internal scratch']
  %s0 = inlined_call_operand.vmem [shape: bf16[2,9,9,16], index: 0, kind: input, shape index: {}]
  %s1 = inlined_call_operand.vmem [shape: bf16[64,4], index: 1, kind: input, shape index: {}]
  %s2 = inlined_call_operand.vmem [shape: f32[1,4], index: 2, kind: input, shape index: {}]
  %s3 = inlined_call_operand.vmem [shape: bf16[2,8,8,4], index: 3, kind: output, shape index: {}]
  %s4 = sld [smem:[#allocation0]]
  $region45: #{tpu_custom_call.1} parent=0
    _
  %s6 = ssub.s32 1, %s4
  %s7 = scalar_select 0, %s6, %s4
  loop: start=0, step=1, limit=4
  $region2: #{tpu_custom_call.1} parent=0 // loop_pre_header
    _
  $region3: #{tpu_custom_call.1} parent=0 // loop_header
    %s9 = sphi 0, %s13
    %p10 = scmp.ge.s32.totalorder %s9, 4
    %s16 = sphi 0, %s28
    %s17 = sphi 0, %s24
    %s18 = sphi 0, %s16
    %s19 = sphi 0, %s17
    %s20 = sphi 0, %s18
    %s21 = sphi 0, %s19
    %s31 = sphi 0, %s33
    %s34 = sphi 0, %s31
    %s35 = sphi 0, %s34
    %s51 = sphi 0, %s35
    %s55 = sphi 0, %s55
    %s57 = sphi 0, %s55
    %s58 = sphi 0, %s57
    %s72 = sphi 0, %s58
    %s76 = sphi 0, %s76
    %s78 = sphi 0, %s76
    %s79 = sphi 0, %s78
    %s93 = sphi 0, %s79
    %s101 = sphi 0, %s103
    %s104 = sphi 0, %s101
    %s105 = sphi 0, %s104
    %s121 = sphi 0, %s105
  $region4: #{tpu_custom_call.1} parent=0 // loop_header_branch
    %12 = sbr.rel (%p10) target = $region8
  $region5: #{tpu_custom_call.1} parent=0 // loop_body
    %s14 = ssub.s32 %s9, 1
    %s15 = ssub.s32 %s9, 2
    %s22 = sadd.s32 1, %s17
    %p23 = scmp.ge.s32.totalorder %s22, 1
    %s24 = scalar_select %p23, 0, %s22
    %s25 = sadd.s32 1, %s16
    %s26 = scalar_select %p23, %s25, %s16
    %p27 = scmp.ge.s32.totalorder %s26, 2
    %s28 = scalar_select %p27, 0, %s26
    %s29 = ssub.s32 %s16, %s28
    %p30 = scmp.eq.s32.totalorder %s29, 0
    %s32 = sadd.s32 %s31, 1
    %s33 = scalar_select %p30, %s31, %s32
    %p36 = pneg %p30
    %p37 = scmp.eq.s32.totalorder %s9, 1
    %p38 = por %p36, %p37
    %p39 = scmp.ne.s32.totalorder %s31, %s34
    %p40 = scmp.eq.s32.totalorder %s9, 0
    %p41 = por %p39, %p40
    %p42 = scmp.ne.s32.totalorder %s31, %s34
    %p43 = scmp.eq.s32.totalorder %s14, 1
    %p44 = por %p42, %p43
    %p45 = scmp.ne.s32.totalorder %s34, %s35
    %p46 = scmp.eq.s32.totalorder %s14, 0
    %p47 = por %p45, %p46
    %p48 = scmp.ne.s32.totalorder %s34, %s35
    %p49 = scmp.eq.s32.totalorder %s15, 1
    %p50 = por %p48, %p49
    %p52 = scmp.ne.s32.totalorder %s35, %s51
    %p53 = scmp.eq.s32.totalorder %s15, 0
    %p54 = por %p52, %p53
    %s56 = sadd.s32 %s55, 1
    %p59 = scmp.eq.s32.totalorder %s9, 1
    %p60 = scmp.ne.s32.totalorder %s55, %s57
    %p61 = scmp.eq.s32.totalorder %s9, 0
    %p62 = por %p60, %p61
    %p63 = scmp.ne.s32.totalorder %s55, %s57
    %p64 = scmp.eq.s32.totalorder %s14, 1
    %p65 = por %p63, %p64
    %p66 = scmp.ne.s32.totalorder %s57, %s58
    %p67 = scmp.eq.s32.totalorder %s14, 0
    %p68 = por %p66, %p67
    %p69 = scmp.ne.s32.totalorder %s57, %s58
    %p70 = scmp.eq.s32.totalorder %s15, 1
    %p71 = por %p69, %p70
    %p73 = scmp.ne.s32.totalorder %s58, %s72
    %p74 = scmp.eq.s32.totalorder %s15, 0
    %p75 = por %p73, %p74
    %s77 = sadd.s32 %s76, 1
    %p80 = scmp.eq.s32.totalorder %s9, 1
    %p81 = scmp.ne.s32.totalorder %s76, %s78
    %p82 = scmp.eq.s32.totalorder %s9, 0
    %p83 = por %p81, %p82
    %p84 = scmp.ne.s32.totalorder %s76, %s78
    %p85 = scmp.eq.s32.totalorder %s14, 1
    %p86 = por %p84, %p85
    %p87 = scmp.ne.s32.totalorder %s78, %s79
    %p88 = scmp.eq.s32.totalorder %s14, 0
    %p89 = por %p87, %p88
    %p90 = scmp.ne.s32.totalorder %s78, %s79
    %p91 = scmp.eq.s32.totalorder %s15, 1
    %p92 = por %p90, %p91
    %p94 = scmp.ne.s32.totalorder %s79, %s93
    %p95 = scmp.eq.s32.totalorder %s15, 0
    %p96 = por %p94, %p95
    %s97 = ssub.s32 %s16, %s28
    %s98 = ssub.s32 %s17, %s24
    %s99 = sor.u32 %s97, %s98
    %p100 = scmp.eq.s32.totalorder %s99, 0
    %s102 = sadd.s32 %s101, 1
    %s103 = scalar_select %p100, %s101, %s102
    %p106 = pneg %p100
    %p107 = scmp.eq.s32.totalorder %s9, 1
    %p108 = por %p106, %p107
    %p109 = scmp.ne.s32.totalorder %s101, %s104
    %p110 = scmp.eq.s32.totalorder %s9, 0
    %p111 = por %p109, %p110
    %p112 = scmp.ne.s32.totalorder %s101, %s104
    %p113 = scmp.eq.s32.totalorder %s14, 1
    %p114 = por %p112, %p113
    %p115 = scmp.ne.s32.totalorder %s104, %s105
    %p116 = scmp.eq.s32.totalorder %s14, 0
    %p117 = por %p115, %p116
    %p118 = scmp.ne.s32.totalorder %s104, %s105
    %p119 = scmp.eq.s32.totalorder %s15, 1
    %p120 = por %p118, %p119
    %p122 = scmp.ne.s32.totalorder %s105, %s121
    %p123 = scmp.eq.s32.totalorder %s15, 0
    %p124 = por %p122, %p123
    %p125 = scmp.le.s32.totalorder 1, %s9
    %p126 = scmp.lt.s32.totalorder %s9, 3
    %p127 = pnand %p125, %p126
    %p128 = pneg %p127
    // Predicated region
    $region9: #{tpu_custom_call.1} parent=5 // pred_check
      _
    $region10: #{tpu_custom_call.1} parent=5 // pred_check_branch
      %130 = sbr.rel (%p127) target = $region12
    $region11: #{tpu_custom_call.1} parent=5 // pred_region
      %s131 = ssub.s32 %s9, 1
      // Predicated region
      $region13: #{tpu_custom_call.1} parent=11 // pred_check
        %p132 = pneg %p68
      $region14: #{tpu_custom_call.1} parent=11 // pred_check_branch
        %134 = sbr.rel (%p132) target = $region16
      $region15: #{tpu_custom_call.1} parent=11 // pred_region
        _
      $region16: #{tpu_custom_call.1} parent=11 // pred_fallthru
        _
      // Predicated region
      $region17: #{tpu_custom_call.1} parent=11 // pred_check
        %p135 = pneg %p89
      $region18: #{tpu_custom_call.1} parent=11 // pred_check_branch
        %137 = sbr.rel (%p135) target = $region20
      $region19: #{tpu_custom_call.1} parent=11 // pred_region
        _
      $region20: #{tpu_custom_call.1} parent=11 // pred_fallthru
        _
    $region12: #{tpu_custom_call.1} parent=5 // pred_fallthru
      _
    %p138 = scmp.lt.s32.totalorder %s9, 2
    // Predicated region
    $region21: #{tpu_custom_call.1} parent=5 // pred_check
      %p139 = pneg %p138
    $region22: #{tpu_custom_call.1} parent=5 // pred_check_branch
      %141 = sbr.rel (%p139) target = $region24
    $region23: #{tpu_custom_call.1} parent=5 // pred_region
      // Predicated region
      $region25: #{tpu_custom_call.1} parent=23 // pred_check
        %p142 = pneg %p41
      $region26: #{tpu_custom_call.1} parent=23 // pred_check_branch
        %144 = sbr.rel (%p142) target = $region28
      $region27: #{tpu_custom_call.1} parent=23 // pred_region
        %p145 = scmp.lt.s32.totalorder %s16, 1
        %s146 = scalar_select %p145, %s16, 1
        %s147 = smul.addr %s146, 18
        %s148 = smul.addr %s147, 4
        %s149 = scalar_lea.vmem %s0, %s148
      $region28: #{tpu_custom_call.1} parent=23 // pred_fallthru
        _
    $region24: #{tpu_custom_call.1} parent=5 // pred_fallthru
      _
    %p150 = scmp.le.s32.totalorder 1, %s9
    %p151 = scmp.lt.s32.totalorder %s9, 3
    %p152 = pnand %p150, %p151
    %p153 = pneg %p152
    // Predicated region
    $region29: #{tpu_custom_call.1} parent=5 // pred_check
      _
    $region30: #{tpu_custom_call.1} parent=5 // pred_check_branch
      %155 = sbr.rel (%p152) target = $region32
    $region31: #{tpu_custom_call.1} parent=5 // pred_region
      %s156 = ssub.s32 %s9, 1
      %p157 = scmp.lt.s32.totalorder %s18, 1
      %s158 = scalar_select %p157, %s18, 1
      %s159 = smul.addr %s158, 18
      %s160 = smul.addr %s159, 4
      %s161 = scalar_lea.vmem %s0, %s160
      %p162 = pneg %p47
      %p163 = pneg %p44
      %p164 = pneg %p68
      %p165 = pneg %p65
      %p166 = pneg %p89
      %p167 = pneg %p86
      %p168 = pneg %p117
      %p169 = pneg %p114
      %s170 = smul.u32 8, %s19
      %p171 = scmp.lt.s32.totalorder %s18, 1
      %s172 = scalar_select %p171, %s18, 1
      %p173 = scmp.lt.s32.totalorder %s170, 7
      %s174 = scalar_select %p173, %s170, 7
      %s175 = smul.addr %s172, 8
      %s176 = sadd.s32 %s174, %s175
      %s177 = smul.addr %s176, 4
      %s178 = scalar_lea.vmem %s3, %s177
      %p179 = scmp.lt.s32.totalorder %s18, 1
      %s180 = scalar_select %p179, %s18, 1
      %s181 = smul.addr %s180, 18
      %s182 = smul.addr %s181, 4
      %s183 = scalar_lea.vmem %s0, %s182
      %s184 = smul.u32 8, %s19
      %p185 = scmp.lt.s32.totalorder %s18, 1
      %s186 = scalar_select %p185, %s18, 1
      %p187 = scmp.lt.s32.totalorder %s184, 7
      %s188 = scalar_select %p187, %s184, 7
      %s189 = smul.addr %s186, 8
      %s190 = sadd.s32 %s188, %s189
      %s191 = smul.addr %s190, 4
      %s192 = scalar_lea.vmem %s3, %s191
      %s193 = smul.u32 8, %s19
      %s195 = smul.u32 %s19, 8
      %s196 = smul.u32 %s195, 2
      %s197 = smul.addr %s196, 4
      %s198 = scalar_lea.vmem %s183, %s197
      %v199 = vld [vmem:[%s198] sm:$0xf]
      %v200 = vld [vmem:[%s198 + $0x8] sm:$0xf]
      %v201 = vld [vmem:[%s198 + $0x10] sm:$0xf]
      %v202 = vld [vmem:[%s198 + $0x18] sm:$0xf]
      %v203 = vld [vmem:[%s198 + $0x20] sm:$0xf]
      %v204 = vld [vmem:[%s198 + $0x28] sm:$0xf]
      %v205 = vld [vmem:[%s198 + $0x30] sm:$0xf]
      %v206 = vld [vmem:[%s198 + $0x38] sm:$0xf]
      %v207 = vld [vmem:[%s198 + $0x4] sm:$0x1]
      %v208 = vld [vmem:[%s198 + $0xc] sm:$0x1]
      %v209 = vld [vmem:[%s198 + $0x14] sm:$0x1]
      %v210 = vld [vmem:[%s198 + $0x1c] sm:$0x1]
      %v211 = vld [vmem:[%s198 + $0x24] sm:$0x1]
      %v212 = vld [vmem:[%s198 + $0x2c] sm:$0x1]
      %v213 = vld [vmem:[%s198 + $0x34] sm:$0x1]
      %v214 = vld [vmem:[%s198 + $0x3c] sm:$0x1]
      %s215 = sadd.s32 %s195, 1
      %s216 = smul.u32 %s215, 2
      %s217 = smul.addr %s216, 4
      %s218 = scalar_lea.vmem %s183, %s217
      %v219 = vld [vmem:[%s218] sm:$0xf]
      %v220 = vld [vmem:[%s218 + $0x8] sm:$0xf]
      %v221 = vld [vmem:[%s218 + $0x10] sm:$0xf]
      %v222 = vld [vmem:[%s218 + $0x18] sm:$0xf]
      %v223 = vld [vmem:[%s218 + $0x20] sm:$0xf]
      %v224 = vld [vmem:[%s218 + $0x28] sm:$0xf]
      %v225 = vld [vmem:[%s218 + $0x30] sm:$0xf]
      %v226 = vld [vmem:[%s218 + $0x38] sm:$0xf]
      %v227 = vld [vmem:[%s218 + $0x4] sm:$0x1]
      %v228 = vld [vmem:[%s218 + $0xc] sm:$0x1]
      %v229 = vld [vmem:[%s218 + $0x14] sm:$0x1]
      %v230 = vld [vmem:[%s218 + $0x1c] sm:$0x1]
      %v231 = vld [vmem:[%s218 + $0x24] sm:$0x1]
      %v232 = vld [vmem:[%s218 + $0x2c] sm:$0x1]
      %v233 = vld [vmem:[%s218 + $0x34] sm:$0x1]
      %v234 = vld [vmem:[%s218 + $0x3c] sm:$0x1]
      %v235 = vld [vmem:[%s1] sm:$0xf]
      %v236 = vld [vmem:[%s1 + $0x4] sm:$0xf]
      %vm237 = vsmask.f32 3328
      %vm238 = vsmask.f32 7440
      %vm239 = vmor %vm237, %vm238
      %v241 = vshrl.u32 %v199, 16
      %v243 = vrot.slane %v241, 4
      %v244 = vshll.u32 %v199, 16
      %v246 = vrot.slane %v244, 5
      %v247 = vor.u32 %v243, %v246
      %v248 = vrot.slane %v247, 4
      %v250 = vshll.u32 %v207, 16
      %v252 = vrot.slane %v250, 5
      %v253 = vsel %vm239, %v248, %v252
      %v255 = vshrl.u32 %v200, 16
      %v257 = vrot.slane %v255, 4
      %v258 = vshll.u32 %v200, 16
      %v260 = vrot.slane %v258, 5
      %v261 = vor.u32 %v257, %v260
      %v262 = vrot.slane %v261, 4
      %v264 = vshll.u32 %v208, 16
      %v266 = vrot.slane %v264, 5
      %v267 = vsel %vm239, %v262, %v266
      %v269 = vshrl.u32 %v201, 16
      %v271 = vrot.slane %v269, 4
      %v272 = vshll.u32 %v201, 16
      %v274 = vrot.slane %v272, 5
      %v275 = vor.u32 %v271, %v274
      %v276 = vrot.slane %v275, 4
      %v278 = vshll.u32 %v209, 16
      %v280 = vrot.slane %v278, 5
      %v281 = vsel %vm239, %v276, %v280
      %v283 = vshrl.u32 %v202, 16
      %v285 = vrot.slane %v283, 4
      %v286 = vshll.u32 %v202, 16
      %v288 = vrot.slane %v286, 5
      %v289 = vor.u32 %v285, %v288
      %v290 = vrot.slane %v289, 4
      %v292 = vshll.u32 %v210, 16
      %v294 = vrot.slane %v292, 5
      %v295 = vsel %vm239, %v290, %v294
      %v297 = vshrl.u32 %v203, 16
      %v299 = vrot.slane %v297, 4
      %v300 = vshll.u32 %v203, 16
      %v302 = vrot.slane %v300, 5
      %v303 = vor.u32 %v299, %v302
      %v304 = vrot.slane %v303, 4
      %v306 = vshll.u32 %v211, 16
      %v308 = vrot.slane %v306, 5
      %v309 = vsel %vm239, %v304, %v308
      %v311 = vshrl.u32 %v204, 16
      %v313 = vrot.slane %v311, 4
      %v314 = vshll.u32 %v204, 16
      %v316 = vrot.slane %v314, 5
      %v317 = vor.u32 %v313, %v316
      %v318 = vrot.slane %v317, 4
      %v320 = vshll.u32 %v212, 16
      %v322 = vrot.slane %v320, 5
      %v323 = vsel %vm239, %v318, %v322
      %v325 = vshrl.u32 %v205, 16
      %v327 = vrot.slane %v325, 4
      %v328 = vshll.u32 %v205, 16
      %v330 = vrot.slane %v328, 5
      %v331 = vor.u32 %v327, %v330
      %v332 = vrot.slane %v331, 4
      %v334 = vshll.u32 %v213, 16
      %v336 = vrot.slane %v334, 5
      %v337 = vsel %vm239, %v332, %v336
      %v339 = vshrl.u32 %v206, 16
      %v341 = vrot.slane %v339, 4
      %v342 = vshll.u32 %v206, 16
      %v344 = vrot.slane %v342, 5
      %v345 = vor.u32 %v341, %v344
      %v346 = vrot.slane %v345, 4
      %v348 = vshll.u32 %v214, 16
      %v350 = vrot.slane %v348, 5
      %v351 = vsel %vm239, %v346, %v350
      %v352 = vld [vmem:[%s1 + $0x8] sm:$0xf]
      %v353 = vld [vmem:[%s1 + $0xc] sm:$0xf]
      %v354 = vunpack.c.l.b16 %v253
      %v355 = vunpack.c.l.b16 %v267
      %v356 = vunpack.c.l.b16 %v281
      %v357 = vunpack.c.l.b16 %v295
      %v358 = vunpack.c.l.b16 %v309
      %v359 = vunpack.c.l.b16 %v323
      %v360 = vunpack.c.l.b16 %v337
      %v361 = vunpack.c.l.b16 %v351
      %v362 = vpack.c.b16 %v355, %v354
      %v363 = vpack.c.b16 %v357, %v356
      %v364 = vpack.c.b16 %v359, %v358
      %v365 = vpack.c.b16 %v361, %v360
      %v368 = vunpack.c.l.b16 %v352
      %v369 = vunpack.c.l.b16 %v353
      %v370 = vpack.c.b16 %v369, %v368
      %vm372 = vcmask 130048
      %v374 = vsel %vm372, %v362, 0
      %v377 = vsel %vm372, %v363, 0
      %v380 = vsel %vm372, %v364, 0
      %v383 = vsel %vm372, %v365, 0
      %385 = vmatprep.subr.bf16.mxu0 0
      %386 = vmatpush1.bf16.msra.mxu0 %v370
      %387 = vmatprep.subr.bf16.mxu0 0
      %388 = vmatpush1.bf16.msra.mxu0 0
      %389 = vmatprep.subr.bf16.mxu0 0
      %390 = vmatpush1.bf16.msra.mxu0 0
      %391 = vmatprep.subr.bf16.mxu0 0
      %392 = vmatpush1.bf16.msra.mxu0 0
      %393 = vmatprep.subr.bf16.mxu0 0
      %394 = vmatpush1.bf16.msra.mxu0 0
      %395 = vmatprep.subr.bf16.mxu0 0
      %396 = vmatpush1.bf16.msra.mxu0 0
      %397 = vmatprep.subr.bf16.mxu0 0
      %398 = vmatpush1.bf16.msra.mxu0 0
      %399 = vmatprep.subr.bf16.mxu0 0
      %400 = vmatpush1.bf16.msra.mxu0 0
      %401 = vmatprep.subr.bf16.mxu0 0
      %402 = vmatpush1.bf16.msra.mxu0 0
      %403 = vmatprep.subr.bf16.mxu0 0
      %404 = vmatpush1.bf16.msra.mxu0 0
      %405 = vmatprep.subr.bf16.mxu0 0
      %406 = vmatpush1.bf16.msra.mxu0 0
      %407 = vmatprep.subr.bf16.mxu0 0
      %408 = vmatpush1.bf16.msra.mxu0 0
      %409 = vmatprep.subr.bf16.mxu0 0
      %410 = vmatpush1.bf16.msra.mxu0 0
      %411 = vmatprep.subr.bf16.mxu0 0
      %412 = vmatpush1.bf16.msra.mxu0 0
      %413 = vmatprep.subr.bf16.mxu0 0
      %414 = vmatpush1.bf16.msra.mxu0 0
      %415 = vmatprep.subr.bf16.mxu0 0
      %416 = vmatpush1.bf16.msra.mxu0 0
      %417 = vmatprep.mubr.bf16.mxu0 0
      %418 = vmatmul.mubr.bf16.gmra.mrb[0].mxu0 %v374
      %v419 = vpop.f32.mrb[0].mxu0
      %v420 = vadd.f32 0.0, %v419
      %v421 = vpop.f32.mrb[0].mxu0
      %v422 = vpop.f32.mrb[0].mxu0
      %v423 = vadd.f32 0.0, %v422
      %v424 = vpop.f32.mrb[0].mxu0
      %425 = vmatprep.mubr.bf16.mxu0 0
      %426 = vmatmul.mubr.bf16.gmra.mrb[0].mxu0 %v377
      %v427 = vpop.f32.mrb[0].mxu0
      %v428 = vadd.f32 0.0, %v427
      %v429 = vpop.f32.mrb[0].mxu0
      %v430 = vpop.f32.mrb[0].mxu0
      %v431 = vadd.f32 0.0, %v430
      %v432 = vpop.f32.mrb[0].mxu0
      %433 = vmatprep.mubr.bf16.mxu0 0
      %434 = vmatmul.mubr.bf16.gmra.mrb[0].mxu0 %v380
      %v435 = vpop.f32.mrb[0].mxu0
      %v436 = vadd.f32 0.0, %v435
      %v437 = vpop.f32.mrb[0].mxu0
      %v438 = vpop.f32.mrb[0].mxu0
      %v439 = vadd.f32 0.0, %v438
      %v440 = vpop.f32.mrb[0].mxu0
      %441 = vmatprep.mubr.bf16.mxu0 0
      %442 = vmatmul.mubr.bf16.gmra.mrb[0].mxu0 %v383
      %v443 = vpop.f32.mrb[0].mxu0
      %v444 = vadd.f32 0.0, %v443
      %v445 = vpop.f32.mrb[0].mxu0
      %v446 = vpop.f32.mrb[0].mxu0
      %v447 = vadd.f32 0.0, %v446
      %v448 = vpop.f32.mrb[0].mxu0
      %449 = vdwg.mxu0
      %v458 = vunpack.c.l.b16 %v199
      %v459 = vunpack.c.l.b16 %v200
      %v460 = vunpack.c.l.b16 %v201
      %v461 = vunpack.c.l.b16 %v202
      %v462 = vunpack.c.l.b16 %v203
      %v463 = vunpack.c.l.b16 %v204
      %v464 = vunpack.c.l.b16 %v205
      %v465 = vunpack.c.l.b16 %v206
      %v466 = vpack.c.b16 %v459, %v458
      %v467 = vpack.c.b16 %v461, %v460
      %v468 = vpack.c.b16 %v463, %v462
      %v469 = vpack.c.b16 %v465, %v464
      %v472 = vunpack.c.l.b16 %v235
      %v473 = vunpack.c.l.b16 %v236
      %v474 = vpack.c.b16 %v473, %v472
      %v477 = vsel %vm372, %v466, 0
      %v480 = vsel %vm372, %v467, 0
      %v483 = vsel %vm372, %v468, 0
      %v486 = vsel %vm372, %v469, 0
      %488 = vmatprep.subr.bf16.mxu0 0
      %489 = vmatpush1.bf16.msra.mxu0 %v474
      %490 = vmatprep.subr.bf16.mxu0 0
      %491 = vmatpush1.bf16.msra.mxu0 0
      %492 = vmatprep.subr.bf16.mxu0 0
      %493 = vmatpush1.bf16.msra.mxu0 0
      %494 = vmatprep.subr.bf16.mxu0 0
      %495 = vmatpush1.bf16.msra.mxu0 0
      %496 = vmatprep.subr.bf16.mxu0 0
      %497 = vmatpush1.bf16.msra.mxu0 0
      %498 = vmatprep.subr.bf16.mxu0 0
      %499 = vmatpush1.bf16.msra.mxu0 0
      %500 = vmatprep.subr.bf16.mxu0 0
      %501 = vmatpush1.bf16.msra.mxu0 0
      %502 = vmatprep.subr.bf16.mxu0 0
      %503 = vmatpush1.bf16.msra.mxu0 0
      %504 = vmatprep.subr.bf16.mxu0 0
      %505 = vmatpush1.bf16.msra.mxu0 0
      %506 = vmatprep.subr.bf16.mxu0 0
      %507 = vmatpush1.bf16.msra.mxu0 0
      %508 = vmatprep.subr.bf16.mxu0 0
      %509 = vmatpush1.bf16.msra.mxu0 0
      %510 = vmatprep.subr.bf16.mxu0 0
      %511 = vmatpush1.bf16.msra.mxu0 0
      %512 = vmatprep.subr.bf16.mxu0 0
      %513 = vmatpush1.bf16.msra.mxu0 0
      %514 = vmatprep.subr.bf16.mxu0 0
      %515 = vmatpush1.bf16.msra.mxu0 0
      %516 = vmatprep.subr.bf16.mxu0 0
      %517 = vmatpush1.bf16.msra.mxu0 0
      %518 = vmatprep.subr.bf16.mxu0 0
      %519 = vmatpush1.bf16.msra.mxu0 0
      %520 = vmatprep.mubr.bf16.mxu0 0
      %521 = vmatmul.mubr.bf16.gmra.mrb[0].mxu0 %v477
      %v522 = vpop.f32.mrb[0].mxu0
      %v523 = vadd.f32 %v420, %v522
      %v524 = vpop.f32.mrb[0].mxu0
      %v525 = vpop.f32.mrb[0].mxu0
      %v526 = vadd.f32 %v423, %v525
      %v527 = vpop.f32.mrb[0].mxu0
      %528 = vmatprep.mubr.bf16.mxu0 0
      %529 = vmatmul.mubr.bf16.gmra.mrb[0].mxu0 %v480
      %v530 = vpop.f32.mrb[0].mxu0
      %v531 = vadd.f32 %v428, %v530
      %v532 = vpop.f32.mrb[0].mxu0
      %v533 = vpop.f32.mrb[0].mxu0
      %v534 = vadd.f32 %v431, %v533
      %v535 = vpop.f32.mrb[0].mxu0
      %536 = vmatprep.mubr.bf16.mxu0 0
      %537 = vmatmul.mubr.bf16.gmra.mrb[0].mxu0 %v483
      %v538 = vpop.f32.mrb[0].mxu0
      %v539 = vadd.f32 %v436, %v538
      %v540 = vpop.f32.mrb[0].mxu0
      %v541 = vpop.f32.mrb[0].mxu0
      %v542 = vadd.f32 %v439, %v541
      %v543 = vpop.f32.mrb[0].mxu0
      %544 = vmatprep.mubr.bf16.mxu0 0
      %545 = vmatmul.mubr.bf16.gmra.mrb[0].mxu0 %v486
      %v546 = vpop.f32.mrb[0].mxu0
      %v547 = vadd.f32 %v444, %v546
      %v548 = vpop.f32.mrb[0].mxu0
      %v549 = vpop.f32.mrb[0].mxu0
      %v550 = vadd.f32 %v447, %v549
      %v551 = vpop.f32.mrb[0].mxu0
      %552 = vdwg.mxu0
      %v553 = vld [vmem:[%s1 + $0x10] sm:$0xf]
      %v554 = vld [vmem:[%s1 + $0x14] sm:$0xf]
      %v563 = vunpack.c.l.b16 %v219
      %v564 = vunpack.c.l.b16 %v220
      %v565 = vunpack.c.l.b16 %v221
      %v566 = vunpack.c.l.b16 %v222
      %v567 = vunpack.c.l.b16 %v223
      %v568 = vunpack.c.l.b16 %v224
      %v569 = vunpack.c.l.b16 %v225
      %v570 = vunpack.c.l.b16 %v226
      %v571 = vpack.c.b16 %v564, %v563
      %v572 = vpack.c.b16 %v566, %v565
      %v573 = vpack.c.b16 %v568, %v567
      %v574 = vpack.c.b16 %v570, %v569
      %v577 = vunpack.c.l.b16 %v553
      %v578 = vunpack.c.l.b16 %v554
      %v579 = vpack.c.b16 %v578, %v577
      %v582 = vsel %vm372, %v571, 0
      %v585 = vsel %vm372, %v572, 0
      %v588 = vsel %vm372, %v573, 0
      %v591 = vsel %vm372, %v574, 0
      %593 = vmatprep.subr.bf16.mxu0 0
      %594 = vmatpush1.bf16.msra.mxu0 %v579
      %595 = vmatprep.subr.bf16.mxu0 0
      %596 = vmatpush1.bf16.msra.mxu0 0
      %597 = vmatprep.subr.bf16.mxu0 0
      %598 = vmatpush1.bf16.msra.mxu0 0
      %599 = vmatprep.subr.bf16.mxu0 0
      %600 = vmatpush1.bf16.msra.mxu0 0
      %601 = vmatprep.subr.bf16.mxu0 0
      %602 = vmatpush1.bf16.msra.mxu0 0
      %603 = vmatprep.subr.bf16.mxu0 0
      %604 = vmatpush1.bf16.msra.mxu0 0
      %605 = vmatprep.subr.bf16.mxu0 0
      %606 = vmatpush1.bf16.msra.mxu0 0
      %607 = vmatprep.subr.bf16.mxu0 0
      %608 = vmatpush1.bf16.msra.mxu0 0
      %609 = vmatprep.subr.bf16.mxu0 0
      %610 = vmatpush1.bf16.msra.mxu0 0
      %611 = vmatprep.subr.bf16.mxu0 0
      %612 = vmatpush1.bf16.msra.mxu0 0
      %613 = vmatprep.subr.bf16.mxu0 0
      %614 = vmatpush1.bf16.msra.mxu0 0
      %615 = vmatprep.subr.bf16.mxu0 0
      %616 = vmatpush1.bf16.msra.mxu0 0
      %617 = vmatprep.subr.bf16.mxu0 0
      %618 = vmatpush1.bf16.msra.mxu0 0
      %619 = vmatprep.subr.bf16.mxu0 0
      %620 = vmatpush1.bf16.msra.mxu0 0
      %621 = vmatprep.subr.bf16.mxu0 0
      %622 = vmatpush1.bf16.msra.mxu0 0
      %623 = vmatprep.subr.bf16.mxu0 0
      %624 = vmatpush1.bf16.msra.mxu0 0
      %625 = vmatprep.mubr.bf16.mxu0 0
      %626 = vmatmul.mubr.bf16.gmra.mrb[0].mxu0 %v582
      %v627 = vpop.f32.mrb[0].mxu0
      %v628 = vadd.f32 0.0, %v627
      %v629 = vpop.f32.mrb[0].mxu0
      %v630 = vpop.f32.mrb[0].mxu0
      %v631 = vadd.f32 0.0, %v630
      %v632 = vpop.f32.mrb[0].mxu0
      %633 = vmatprep.mubr.bf16.mxu0 0
      %634 = vmatmul.mubr.bf16.gmra.mrb[0].mxu0 %v585
      %v635 = vpop.f32.mrb[0].mxu0
      %v636 = vadd.f32 0.0, %v635
      %v637 = vpop.f32.mrb[0].mxu0
      %v638 = vpop.f32.mrb[0].mxu0
      %v639 = vadd.f32 0.0, %v638
      %v640 = vpop.f32.mrb[0].mxu0
      %641 = vmatprep.mubr.bf16.mxu0 0
      %642 = vmatmul.mubr.bf16.gmra.mrb[0].mxu0 %v588
      %v643 = vpop.f32.mrb[0].mxu0
      %v644 = vadd.f32 0.0, %v643
      %v645 = vpop.f32.mrb[0].mxu0
      %v646 = vpop.f32.mrb[0].mxu0
      %v647 = vadd.f32 0.0, %v646
      %v648 = vpop.f32.mrb[0].mxu0
      %649 = vmatprep.mubr.bf16.mxu0 0
      %650 = vmatmul.mubr.bf16.gmra.mrb[0].mxu0 %v591
      %v651 = vpop.f32.mrb[0].mxu0
      %v652 = vadd.f32 0.0, %v651
      %v653 = vpop.f32.mrb[0].mxu0
      %v654 = vpop.f32.mrb[0].mxu0
      %v655 = vadd.f32 0.0, %v654
      %v656 = vpop.f32.mrb[0].mxu0
      %657 = vdwg.mxu0
      %v658 = vadd.f32 %v523, %v628
      %v659 = vadd.f32 %v526, %v631
      %v660 = vadd.f32 %v531, %v636
      %v661 = vadd.f32 %v534, %v639
      %v662 = vadd.f32 %v539, %v644
      %v663 = vadd.f32 %v542, %v647
      %v664 = vadd.f32 %v547, %v652
      %v665 = vadd.f32 %v550, %v655
      %v667 = vshrl.u32 %v219, 16
      %v669 = vrot.slane %v667, 4
      %v670 = vshll.u32 %v219, 16
      %v672 = vrot.slane %v670, 5
      %v673 = vor.u32 %v669, %v672
      %v674 = vrot.slane %v673, 4
      %v676 = vshll.u32 %v227, 16
      %v678 = vrot.slane %v676, 5
      %v679 = vsel %vm239, %v674, %v678
      %v681 = vshrl.u32 %v220, 16
      %v683 = vrot.slane %v681, 4
      %v684 = vshll.u32 %v220, 16
      %v686 = vrot.slane %v684, 5
      %v687 = vor.u32 %v683, %v686
      %v688 = vrot.slane %v687, 4
      %v690 = vshll.u32 %v228, 16
      %v692 = vrot.slane %v690, 5
      %v693 = vsel %vm239, %v688, %v692
      %v695 = vshrl.u32 %v221, 16
      %v697 = vrot.slane %v695, 4
      %v698 = vshll.u32 %v221, 16
      %v700 = vrot.slane %v698, 5
      %v701 = vor.u32 %v697, %v700
      %v702 = vrot.slane %v701, 4
      %v704 = vshll.u32 %v229, 16
      %v706 = vrot.slane %v704, 5
      %v707 = vsel %vm239, %v702, %v706
      %v709 = vshrl.u32 %v222, 16
      %v711 = vrot.slane %v709, 4
      %v712 = vshll.u32 %v222, 16
      %v714 = vrot.slane %v712, 5
      %v715 = vor.u32 %v711, %v714
      %v716 = vrot.slane %v715, 4
      %v718 = vshll.u32 %v230, 16
      %v720 = vrot.slane %v718, 5
      %v721 = vsel %vm239, %v716, %v720
      %v723 = vshrl.u32 %v223, 16
      %v725 = vrot.slane %v723, 4
      %v726 = vshll.u32 %v223, 16
      %v728 = vrot.slane %v726, 5
      %v729 = vor.u32 %v725, %v728
      %v730 = vrot.slane %v729, 4
      %v732 = vshll.u32 %v231, 16
      %v734 = vrot.slane %v732, 5
      %v735 = vsel %vm239, %v730, %v734
      %v737 = vshrl.u32 %v224, 16
      %v739 = vrot.slane %v737, 4
      %v740 = vshll.u32 %v224, 16
      %v742 = vrot.slane %v740, 5
      %v743 = vor.u32 %v739, %v742
      %v744 = vrot.slane %v743, 4
      %v746 = vshll.u32 %v232, 16
      %v748 = vrot.slane %v746, 5
      %v749 = vsel %vm239, %v744, %v748
      %v751 = vshrl.u32 %v225, 16
      %v753 = vrot.slane %v751, 4
      %v754 = vshll.u32 %v225, 16
      %v756 = vrot.slane %v754, 5
      %v757 = vor.u32 %v753, %v756
      %v758 = vrot.slane %v757, 4
      %v760 = vshll.u32 %v233, 16
      %v762 = vrot.slane %v760, 5
      %v763 = vsel %vm239, %v758, %v762
      %v765 = vshrl.u32 %v226, 16
      %v767 = vrot.slane %v765, 4
      %v768 = vshll.u32 %v226, 16
      %v770 = vrot.slane %v768, 5
      %v771 = vor.u32 %v767, %v770
      %v772 = vrot.slane %v771, 4
      %v774 = vshll.u32 %v234, 16
      %v776 = vrot.slane %v774, 5
      %v777 = vsel %vm239, %v772, %v776
      %v778 = vld [vmem:[%s1 + $0x18] sm:$0xf]
      %v779 = vld [vmem:[%s1 + $0x1c] sm:$0xf]
      %v780 = vunpack.c.l.b16 %v679
      %v781 = vunpack.c.l.b16 %v693
      %v782 = vunpack.c.l.b16 %v707
      %v783 = vunpack.c.l.b16 %v721
      %v784 = vunpack.c.l.b16 %v735
      %v785 = vunpack.c.l.b16 %v749
      %v786 = vunpack.c.l.b16 %v763
      %v787 = vunpack.c.l.b16 %v777
      %v788 = vpack.c.b16 %v781, %v780
      %v789 = vpack.c.b16 %v783, %v782
      %v790 = vpack.c.b16 %v785, %v784
      %v791 = vpack.c.b16 %v787, %v786
      %v794 = vunpack.c.l.b16 %v778
      %v795 = vunpack.c.l.b16 %v779
      %v796 = vpack.c.b16 %v795, %v794
      %v799 = vsel %vm372, %v788, 0
      %v802 = vsel %vm372, %v789, 0
      %v805 = vsel %vm372, %v790, 0
      %v808 = vsel %vm372, %v791, 0
      %810 = vmatprep.subr.bf16.mxu0 0
      %811 = vmatpush1.bf16.msra.mxu0 %v796
      %812 = vmatprep.subr.bf16.mxu0 0
      %813 = vmatpush1.bf16.msra.mxu0 0
      %814 = vmatprep.subr.bf16.mxu0 0
      %815 = vmatpush1.bf16.msra.mxu0 0
      %816 = vmatprep.subr.bf16.mxu0 0
      %817 = vmatpush1.bf16.msra.mxu0 0
      %818 = vmatprep.subr.bf16.mxu0 0
      %819 = vmatpush1.bf16.msra.mxu0 0
      %820 = vmatprep.subr.bf16.mxu0 0
      %821 = vmatpush1.bf16.msra.mxu0 0
      %822 = vmatprep.subr.bf16.mxu0 0
      %823 = vmatpush1.bf16.msra.mxu0 0
      %824 = vmatprep.subr.bf16.mxu0 0
      %825 = vmatpush1.bf16.msra.mxu0 0
      %826 = vmatprep.subr.bf16.mxu0 0
      %827 = vmatpush1.bf16.msra.mxu0 0
      %828 = vmatprep.subr.bf16.mxu0 0
      %829 = vmatpush1.bf16.msra.mxu0 0
      %830 = vmatprep.subr.bf16.mxu0 0
      %831 = vmatpush1.bf16.msra.mxu0 0
      %832 = vmatprep.subr.bf16.mxu0 0
      %833 = vmatpush1.bf16.msra.mxu0 0
      %834 = vmatprep.subr.bf16.mxu0 0
      %835 = vmatpush1.bf16.msra.mxu0 0
      %836 = vmatprep.subr.bf16.mxu0 0
      %837 = vmatpush1.bf16.msra.mxu0 0
      %838 = vmatprep.subr.bf16.mxu0 0
      %839 = vmatpush1.bf16.msra.mxu0 0
      %840 = vmatprep.subr.bf16.mxu0 0
      %841 = vmatpush1.bf16.msra.mxu0 0
      %842 = vmatprep.mubr.bf16.mxu0 0
      %843 = vmatmul.mubr.bf16.gmra.mrb[0].mxu0 %v799
      %v844 = vpop.f32.mrb[0].mxu0
      %v845 = vadd.f32 0.0, %v844
      %v846 = vpop.f32.mrb[0].mxu0
      %v847 = vpop.f32.mrb[0].mxu0
      %v848 = vadd.f32 0.0, %v847
      %v849 = vpop.f32.mrb[0].mxu0
      %850 = vmatprep.mubr.bf16.mxu0 0
      %851 = vmatmul.mubr.bf16.gmra.mrb[0].mxu0 %v802
      %v852 = vpop.f32.mrb[0].mxu0
      %v853 = vadd.f32 0.0, %v852
      %v854 = vpop.f32.mrb[0].mxu0
      %v855 = vpop.f32.mrb[0].mxu0
      %v856 = vadd.f32 0.0, %v855
      %v857 = vpop.f32.mrb[0].mxu0
      %858 = vmatprep.mubr.bf16.mxu0 0
      %859 = vmatmul.mubr.bf16.gmra.mrb[0].mxu0 %v805
      %v860 = vpop.f32.mrb[0].mxu0
      %v861 = vadd.f32 0.0, %v860
      %v862 = vpop.f32.mrb[0].mxu0
      %v863 = vpop.f32.mrb[0].mxu0
      %v864 = vadd.f32 0.0, %v863
      %v865 = vpop.f32.mrb[0].mxu0
      %866 = vmatprep.mubr.bf16.mxu0 0
      %867 = vmatmul.mubr.bf16.gmra.mrb[0].mxu0 %v808
      %v868 = vpop.f32.mrb[0].mxu0
      %v869 = vadd.f32 0.0, %v868
      %v870 = vpop.f32.mrb[0].mxu0
      %v871 = vpop.f32.mrb[0].mxu0
      %v872 = vadd.f32 0.0, %v871
      %v873 = vpop.f32.mrb[0].mxu0
      %874 = vdwg.mxu0
      %v875 = vadd.f32 %v658, %v845
      %v876 = vadd.f32 %v659, %v848
      %v877 = vadd.f32 %v660, %v853
      %v878 = vadd.f32 %v661, %v856
      %v879 = vadd.f32 %v662, %v861
      %v880 = vadd.f32 %v663, %v864
      %v881 = vadd.f32 %v664, %v869
      %v882 = vadd.f32 %v665, %v872
      %v883 = vld [vmem:[%s2] sm:$0x1]
      %v885 = vlaneseq
      %v886 = vshrl.u32 %v885, 7
      %v887 = vsub.s32 0, %v886
      %v888 = vrot.slane %v883, %v887
      %v890 = vadd.f32 %v875, %v888
      %v891 = vadd.f32 %v876, %v888
      %v892 = vadd.f32 %v877, %v888
      %v893 = vadd.f32 %v878, %v888
      %v894 = vadd.f32 %v879, %v888
      %v895 = vadd.f32 %v880, %v888
      %v896 = vadd.f32 %v881, %v888
      %v897 = vadd.f32 %v882, %v888
      %v898 = vmul.f32 %v890, 0.1
      %v899 = vmul.f32 %v891, 0.1
      %v900 = vmul.f32 %v892, 0.1
      %v901 = vmul.f32 %v893, 0.1
      %v902 = vmul.f32 %v894, 0.1
      %v903 = vmul.f32 %v895, 0.1
      %v904 = vmul.f32 %v896, 0.1
      %v905 = vmul.f32 %v897, 0.1
      %v906 = vmax.f32 %v890, %v898
      %v907 = vmax.f32 %v891, %v899
      %v908 = vmax.f32 %v892, %v900
      %v909 = vmax.f32 %v893, %v901
      %v910 = vmax.f32 %v894, %v902
      %v911 = vmax.f32 %v895, %v903
      %v912 = vmax.f32 %v896, %v904
      %v913 = vmax.f32 %v897, %v905
      %v914 = vpack.c.bf16 %v906, %v906
      %v915 = vpack.c.bf16 %v907, %v907
      %v916 = vpack.c.bf16 %v908, %v908
      %v917 = vpack.c.bf16 %v909, %v909
      %v918 = vpack.c.bf16 %v910, %v910
      %v919 = vpack.c.bf16 %v911, %v911
      %v920 = vpack.c.bf16 %v912, %v912
      %v921 = vpack.c.bf16 %v913, %v913
      %vm922 = vcmask 27648
      %923 = vst.msk [vmem:[%s192] sm:$0xf] %vm922, %v914
      %924 = vst.msk [vmem:[%s192 + $0x4] sm:$0xf] %vm922, %v915
      %925 = vst.msk [vmem:[%s192 + $0x8] sm:$0xf] %vm922, %v916
      %926 = vst.msk [vmem:[%s192 + $0xc] sm:$0xf] %vm922, %v917
      %927 = vst.msk [vmem:[%s192 + $0x10] sm:$0xf] %vm922, %v918
      %928 = vst.msk [vmem:[%s192 + $0x14] sm:$0xf] %vm922, %v919
      %929 = vst.msk [vmem:[%s192 + $0x18] sm:$0xf] %vm922, %v920
      %930 = vst.msk [vmem:[%s192 + $0x1c] sm:$0xf] %vm922, %v921
      %s931 = smul.u32 8, %s19
      %p932 = scmp.lt.s32.totalorder %s18, 1
      %s933 = scalar_select %p932, %s18, 1
      %p934 = scmp.lt.s32.totalorder %s931, 7
      %s935 = scalar_select %p934, %s931, 7
      %s936 = smul.addr %s933, 8
      %s937 = sadd.s32 %s935, %s936
      %s938 = smul.addr %s937, 4
      %s939 = scalar_lea.vmem %s3, %s938
      // Predicated region
      $region33: #{tpu_custom_call.1} parent=31 // pred_check
        %p940 = pneg %p114
      $region34: #{tpu_custom_call.1} parent=31 // pred_check_branch
        %942 = sbr.rel (%p940) target = $region36
      $region35: #{tpu_custom_call.1} parent=31 // pred_region
        %s943 = smul.u32 8, %s19
      $region36: #{tpu_custom_call.1} parent=31 // pred_fallthru
        _
    $region32: #{tpu_custom_call.1} parent=5 // pred_fallthru
      _
    %p944 = scmp.le.s32.totalorder 2, %s9
    // Predicated region
    $region37: #{tpu_custom_call.1} parent=5 // pred_check
      %p945 = pneg %p944
    $region38: #{tpu_custom_call.1} parent=5 // pred_check_branch
      %947 = sbr.rel (%p945) target = $region40
    $region39: #{tpu_custom_call.1} parent=5 // pred_region
      %s948 = ssub.s32 %s9, 2
      // Predicated region
      $region41: #{tpu_custom_call.1} parent=39 // pred_check
        %p949 = pneg %p120
      $region42: #{tpu_custom_call.1} parent=39 // pred_check_branch
        %951 = sbr.rel (%p949) target = $region44
      $region43: #{tpu_custom_call.1} parent=39 // pred_region
        %s952 = smul.u32 8, %s21
        %p953 = scmp.lt.s32.totalorder %s20, 1
        %s954 = scalar_select %p953, %s20, 1
        %p955 = scmp.lt.s32.totalorder %s952, 7
        %s956 = scalar_select %p955, %s952, 7
        %s957 = smul.addr %s954, 8
        %s958 = sadd.s32 %s956, %s957
        %s959 = smul.addr %s958, 4
        %s960 = scalar_lea.vmem %s3, %s959
      $region44: #{tpu_custom_call.1} parent=39 // pred_fallthru
        _
    $region40: #{tpu_custom_call.1} parent=5 // pred_fallthru
      _
  $region6: #{tpu_custom_call.1} parent=0 // loop_footer
    %s13 = sadd.s32 1, %s9
  $region7: #{tpu_custom_call.1} parent=0 // loop_footer_branch
    %8 = sbr.rel target = $region3
  $region8: #{tpu_custom_call.1} parent=0 // loop_exit
    _

</llo_original>
